<compile_context>
chip_gen: v7x
topology: tpu7x:2x2x1
jax: 0.10.0
libtpu: 0.0.40
codegen_flags: <defaults>
</compile_context>

<pallas_src>
import math

import jax
import jax.numpy as jnp
from jax.experimental import pallas as pl
from jax.experimental.pallas import tpu as pltpu


FEAT = 1000          # backbone feature dim (ResNeXt classifier width)
FEAT_PAD = 1024      # padded to multiple of 128 for clean MXU K tiling
HID = 256            # hidden width of both heads
N_A, N_B = 3, 30     # real logit widths
OUT_PAD = 128        # lane-dense padded logit width


def _round_up(x, m):
    return (x + m - 1) // m * m


def _hier_kernel(
    pooled_ref,                 # [BT, C_pad]      per-batch-tile input
    wf_ref, bf_ref,             # [C_pad, 1024], [1, 1024]   backbone stand-in
    w1_ref, b1_ref,             # [1024, 512], [1, 512]      fused (A.l1 | B.l1-feat)
    wa2_ref, ba2_ref,           # [256, 256], [1, 256]
    wa3_ref, ba3_ref,           # [256, 128], [1, 128]       (cols >=3 are zero)
    wb1a_ref,                   # [128, 256]                 (rows >=3 are zero)
    wb2_ref, bb2_ref,           # [256, 256], [1, 256]
    wb3_ref, bb3_ref,           # [256, 128], [1, 128]       (cols >=30 are zero)
    out_a_ref,                  # [BT, 128]
    out_b_ref,                  # [BT, 128]
):
    f32 = jnp.float32

    # ---- backbone stand-in: pooled -> 1024-dim feature (1000 real + zero pad) ----
    feat = jnp.dot(pooled_ref[...], wf_ref[...],
                   preferred_element_type=f32) + bf_ref[...]          # [BT, 1024]

    # ---- fused first layers of head A and head B (shared LHS, shared K) ----
    hg = jnp.dot(feat, w1_ref[...], preferred_element_type=f32) + b1_ref[...]  # [BT, 512]

    # ---- head A: 1000 -> 256 -> 256 -> 3(pad 128) ----
    h = jnp.maximum(hg[:, :HID], 0.0)
    h = jnp.maximum(jnp.dot(h, wa2_ref[...], preferred_element_type=f32)
                    + ba2_ref[...], 0.0)
    la = jnp.dot(h, wa3_ref[...], preferred_element_type=f32) + ba3_ref[...]   # [BT, 128]

    # ---- head B: concat(feat, logits_A) -> 256 -> 256 -> 30(pad 128) ----
    # concat expressed as split matmul: feat part already in hg[:, 256:] (bias fused too)
    g = jnp.maximum(hg[:, HID:] + jnp.dot(la, wb1a_ref[...],
                                          preferred_element_type=f32), 0.0)
    g = jnp.maximum(jnp.dot(g, wb2_ref[...], preferred_element_type=f32)
                    + bb2_ref[...], 0.0)
    lb = jnp.dot(g, wb3_ref[...], preferred_element_type=f32) + bb3_ref[...]   # [BT, 128]

    # lane-dense (128-wide) unmasked stores; wrapper slices back to 3 / 30
    out_a_ref[...] = la
    out_b_ref[...] = lb


@jax.jit
def demo_model_forward(x_nchw, packed):
    """x_nchw: [B, C, H, W] float32. Returns (logits_A [B,3], logits_B [B,30])."""
    B, C, H, W = x_nchw.shape

    # Hoisted backbone pooling (global average over H, W) -> tiny [B, C] input.
    pooled = jnp.mean(x_nchw, axis=(2, 3))                   # [B, C]

    C_pad = packed["wf"].shape[0]
    BT = min(128, _round_up(B, 8))                           # batch tile (multiple of 8)
    B_pad = _round_up(B, BT)
    pooled_pad = jnp.zeros((B_pad, C_pad), jnp.float32).at[:B, :C].set(pooled)

    grid = (B_pad // BT,)

    def tile_spec(shape):       # batch-tiled arrays
        return pl.BlockSpec(shape, lambda i: (i, 0))

    def fixed_spec(shape):      # VMEM-resident weights (constant block index)
        return pl.BlockSpec(shape, lambda i: (0, 0))

    weight_keys = ("wf", "bf", "w1", "b1", "wa2", "ba2", "wa3", "ba3",
                   "wb1a", "wb2", "bb2", "wb3", "bb3")
    weights = [packed[k] for k in weight_keys]

    in_specs = [tile_spec((BT, C_pad))] + [fixed_spec(w.shape) for w in weights]

    weight_bytes = sum(int(w.size) * 4 for w in weights)
    flops = 2 * B_pad * (C_pad * FEAT_PAD            # backbone projection
                         + FEAT_PAD * 2 * HID        # fused layer-1 (A | B-feat)
                         + HID * HID + HID * OUT_PAD # head A l2, l3
                         + OUT_PAD * HID             # la @ wb1a
                         + HID * HID + HID * OUT_PAD)  # head B l2, l3
    bytes_accessed = (int(pooled_pad.size) * 4 + weight_bytes
                      + 2 * B_pad * OUT_PAD * 4)

    out_a_pad, out_b_pad = pl.pallas_call(
        _hier_kernel,
        grid=grid,
        out_shape=(
            jax.ShapeDtypeStruct((B_pad, OUT_PAD), jnp.float32),
            jax.ShapeDtypeStruct((B_pad, OUT_PAD), jnp.float32),
        ),
        in_specs=in_specs,
        out_specs=(tile_spec((BT, OUT_PAD)), tile_spec((BT, OUT_PAD))),
        compiler_params=pltpu.CompilerParams(
            dimension_semantics=("parallel",),      # shard batch tiles across TCs
            vmem_limit_bytes=32 << 20,              # ~3 MB weights + 2x tile buffers
        ),
        cost_estimate=pl.CostEstimate(
            flops=flops, transcendentals=0, bytes_accessed=bytes_accessed),
    )(pooled_pad, *weights)

    return out_a_pad[:B, :N_A], out_b_pad[:B, :N_B]


def init_params(key, in_channels, feat_dim=FEAT, hidden=(HID, HID),
                n_a=N_A, n_b=N_B):
    """Deterministic synthetic parameters (PyTorch-Linear-style uniform init)."""
    def linear(k, fan_in, fan_out):
        kw, kb = jax.random.split(k)
        bound = 1.0 / math.sqrt(fan_in)
        w = jax.random.uniform(kw, (fan_in, fan_out), jnp.float32, -bound, bound)
        b = jax.random.uniform(kb, (1, fan_out), jnp.float32, -bound, bound)
        return w, b

    ks = jax.random.split(key, 7)
    p = {}
    p["wf"], p["bf"] = linear(ks[0], in_channels, feat_dim)
    p["wa1"], p["ba1"] = linear(ks[1], feat_dim, hidden[0])
    p["wa2"], p["ba2"] = linear(ks[2], hidden[0], hidden[1])
    p["wa3"], p["ba3"] = linear(ks[3], hidden[1], n_a)
    # head B layer 1 takes concat(feat, logits_A): split into two weight blocks
    wb1, p["bb1"] = linear(ks[4], feat_dim + n_a, hidden[0])
    p["wb1f"] = wb1[:feat_dim]
    p["wb1a"] = wb1[feat_dim:]
    p["wb2"], p["bb2"] = linear(ks[5], hidden[0], hidden[1])
    p["wb3"], p["bb3"] = linear(ks[6], hidden[1], n_b)
    return p


def pack_params(p):
    """Pad / fuse raw parameters into the MXU-friendly kernel layout."""
    C = p["wf"].shape[0]
    C_pad = _round_up(max(C, 1), 128)

    def pad2(a, rows, cols):
        out = jnp.zeros((rows, cols), jnp.float32)
        return out.at[:a.shape[0], :a.shape[1]].set(a)

    packed = {}
    packed["wf"] = pad2(p["wf"], C_pad, FEAT_PAD)
    packed["bf"] = pad2(p["bf"], 1, FEAT_PAD)
    # Fuse head-A layer1 with head-B layer1 (feat part): one [1024, 512] weight.
    packed["w1"] = pad2(jnp.concatenate([p["wa1"], p["wb1f"]], axis=1),
                        FEAT_PAD, 2 * HID)
    packed["b1"] = jnp.concatenate([p["ba1"], p["bb1"]], axis=1)
    packed["wa2"], packed["ba2"] = p["wa2"], p["ba2"]
    packed["wa3"] = pad2(p["wa3"], HID, OUT_PAD)
    packed["ba3"] = pad2(p["ba3"], 1, OUT_PAD)
    packed["wb1a"] = pad2(p["wb1a"], OUT_PAD, HID)
    packed["wb2"], packed["bb2"] = p["wb2"], p["bb2"]
    packed["wb3"] = pad2(p["wb3"], HID, OUT_PAD)
    packed["bb3"] = pad2(p["bb3"], 1, OUT_PAD)
    return packed


def _reference_forward(x_nchw, p):
    """Pure-JAX reference on the raw (unpadded, unfused) parameters."""
    B, C, H, W = x_nchw.shape
    pooled = jnp.mean(x_nchw.reshape(B, C, H * W), axis=-1)
    feat = pooled @ p["wf"] + p["bf"]
    h = jnp.maximum(feat @ p["wa1"] + p["ba1"], 0.0)
    h = jnp.maximum(h @ p["wa2"] + p["ba2"], 0.0)
    la = h @ p["wa3"] + p["ba3"]
    g = jnp.maximum(feat @ p["wb1f"] + la @ p["wb1a"] + p["bb1"], 0.0)
    g = jnp.maximum(g @ p["wb2"] + p["bb2"], 0.0)
    lb = g @ p["wb3"] + p["bb3"]
    return la, lb


if __name__ == "__main__":
    key = jax.random.PRNGKey(0)
    k_x, k_p = jax.random.split(key)

    # Small shapes consistent with an image classifier input (NCHW).
    B, C, H, W = 2, 3, 32, 32
    x = jax.random.normal(k_x, (B, C, H, W), dtype=jnp.float32)
    raw_params = init_params(k_p, in_channels=C)
    packed_params = pack_params(raw_params)

    logits_a, logits_b = demo_model_forward(x, packed_params)
    jax.block_until_ready((logits_a, logits_b))

    ref_a, ref_b = _reference_forward(x, raw_params)
    assert logits_a.shape == (B, N_A) and logits_b.shape == (B, N_B)
    assert jnp.allclose(logits_a, ref_a, atol=1e-4, rtol=1e-4)
    assert jnp.allclose(logits_b, ref_b, atol=1e-4, rtol=1e-4)

    print("KERNEL_OK")
</pallas_src>

<mosaic_0001>
module attributes {stable_mosaic.version = 11 : i64} {
  func.func @_hier_kernel(%arg0: i32, %arg1: memref<8x128xf32, #tpu.memory_space<vmem>>, %arg2: memref<128x1024xf32, #tpu.memory_space<vmem>>, %arg3: memref<1x1024xf32, #tpu.memory_space<vmem>>, %arg4: memref<1024x512xf32, #tpu.memory_space<vmem>>, %arg5: memref<1x512xf32, #tpu.memory_space<vmem>>, %arg6: memref<256x256xf32, #tpu.memory_space<vmem>>, %arg7: memref<1x256xf32, #tpu.memory_space<vmem>>, %arg8: memref<256x128xf32, #tpu.memory_space<vmem>>, %arg9: memref<1x128xf32, #tpu.memory_space<vmem>>, %arg10: memref<128x256xf32, #tpu.memory_space<vmem>>, %arg11: memref<256x256xf32, #tpu.memory_space<vmem>>, %arg12: memref<1x256xf32, #tpu.memory_space<vmem>>, %arg13: memref<256x128xf32, #tpu.memory_space<vmem>>, %arg14: memref<1x128xf32, #tpu.memory_space<vmem>>, %arg15: memref<8x128xf32, #tpu.memory_space<vmem>>, %arg16: memref<8x128xf32, #tpu.memory_space<vmem>>) attributes {dimension_semantics = [#tpu.dimension_semantics<parallel>], iteration_bounds = array<i64: 1>, scalar_prefetch = 0 : i64, scratch_operands = 0 : i64, tpu.core_type = #tpu.core_type<tc>, window_params = [{transform_indices = @transform_0, window_bounds = array<i64: 8, 128>}, {pipeline_mode = #tpu.pipeline_mode<synchronous>, transform_indices = @transform_1, window_bounds = array<i64: 128, 1024>}, {pipeline_mode = #tpu.pipeline_mode<synchronous>, transform_indices = @transform_2, window_bounds = array<i64: 1, 1024>}, {pipeline_mode = #tpu.pipeline_mode<synchronous>, transform_indices = @transform_3, window_bounds = array<i64: 1024, 512>}, {pipeline_mode = #tpu.pipeline_mode<synchronous>, transform_indices = @transform_4, window_bounds = array<i64: 1, 512>}, {pipeline_mode = #tpu.pipeline_mode<synchronous>, transform_indices = @transform_5, window_bounds = array<i64: 256, 256>}, {pipeline_mode = #tpu.pipeline_mode<synchronous>, transform_indices = @transform_6, window_bounds = array<i64: 1, 256>}, {pipeline_mode = #tpu.pipeline_mode<synchronous>, transform_indices = @transform_7, window_bounds = array<i64: 256, 128>}, {pipeline_mode = #tpu.pipeline_mode<synchronous>, transform_indices = @transform_8, window_bounds = array<i64: 1, 128>}, {pipeline_mode = #tpu.pipeline_mode<synchronous>, transform_indices = @transform_9, window_bounds = array<i64: 128, 256>}, {pipeline_mode = #tpu.pipeline_mode<synchronous>, transform_indices = @transform_10, window_bounds = array<i64: 256, 256>}, {pipeline_mode = #tpu.pipeline_mode<synchronous>, transform_indices = @transform_11, window_bounds = array<i64: 1, 256>}, {pipeline_mode = #tpu.pipeline_mode<synchronous>, transform_indices = @transform_12, window_bounds = array<i64: 256, 128>}, {pipeline_mode = #tpu.pipeline_mode<synchronous>, transform_indices = @transform_13, window_bounds = array<i64: 1, 128>}, {transform_indices = @transform_14, window_bounds = array<i64: 8, 128>}, {transform_indices = @transform_15, window_bounds = array<i64: 8, 128>}]} {
    %c0 = arith.constant 0 : index
    %c0_0 = arith.constant 0 : index
    %0 = vector.load %arg1[%c0, %c0_0] : memref<8x128xf32, #tpu.memory_space<vmem>>, vector<8x128xf32>
    %c0_1 = arith.constant 0 : index
    %c0_2 = arith.constant 0 : index
    %1 = vector.load %arg2[%c0_1, %c0_2] : memref<128x1024xf32, #tpu.memory_space<vmem>>, vector<128x1024xf32>
    %cst = arith.constant dense<0.000000e+00> : vector<8x1024xf32>
    %2 = tpu.matmul %0, %1, %cst {dimension_numbers = #tpu.dot_dimension_numbers<[1], [0], [0], [1], [0, 0, 1, 1], [], []>} : vector<8x128xf32>, vector<128x1024xf32>, vector<8x1024xf32> -> vector<8x1024xf32>
    %c0_3 = arith.constant 0 : index
    %c0_4 = arith.constant 0 : index
    %3 = vector.load %arg3[%c0_3, %c0_4] : memref<1x1024xf32, #tpu.memory_space<vmem>>, vector<1x1024xf32>
    %4 = vector.broadcast %3 : vector<1x1024xf32> to vector<8x1024xf32>
    %5 = arith.addf %2, %4 : vector<8x1024xf32>
    %c0_5 = arith.constant 0 : index
    %c0_6 = arith.constant 0 : index
    %6 = vector.load %arg4[%c0_5, %c0_6] : memref<1024x512xf32, #tpu.memory_space<vmem>>, vector<1024x512xf32>
    %cst_7 = arith.constant dense<0.000000e+00> : vector<8x512xf32>
    %7 = tpu.matmul %5, %6, %cst_7 {dimension_numbers = #tpu.dot_dimension_numbers<[1], [0], [0], [1], [0, 0, 1, 1], [], []>} : vector<8x1024xf32>, vector<1024x512xf32>, vector<8x512xf32> -> vector<8x512xf32>
    %c0_8 = arith.constant 0 : index
    %c0_9 = arith.constant 0 : index
    %8 = vector.load %arg5[%c0_8, %c0_9] : memref<1x512xf32, #tpu.memory_space<vmem>>, vector<1x512xf32>
    %9 = vector.broadcast %8 : vector<1x512xf32> to vector<8x512xf32>
    %10 = arith.addf %7, %9 : vector<8x512xf32>
    %11 = vector.extract_strided_slice %10 {offsets = [0, 0], sizes = [8, 256], strides = [1, 1]} : vector<8x512xf32> to vector<8x256xf32>
    %cst_10 = arith.constant 0.000000e+00 : f32
    %12 = vector.broadcast %cst_10 : f32 to vector<8x256xf32>
    %13 = arith.maximumf %11, %12 : vector<8x256xf32>
    %c0_11 = arith.constant 0 : index
    %c0_12 = arith.constant 0 : index
    %14 = vector.load %arg6[%c0_11, %c0_12] : memref<256x256xf32, #tpu.memory_space<vmem>>, vector<256x256xf32>
    %cst_13 = arith.constant dense<0.000000e+00> : vector<8x256xf32>
    %15 = tpu.matmul %13, %14, %cst_13 {dimension_numbers = #tpu.dot_dimension_numbers<[1], [0], [0], [1], [0, 0, 1, 1], [], []>} : vector<8x256xf32>, vector<256x256xf32>, vector<8x256xf32> -> vector<8x256xf32>
    %c0_14 = arith.constant 0 : index
    %c0_15 = arith.constant 0 : index
    %16 = vector.load %arg7[%c0_14, %c0_15] : memref<1x256xf32, #tpu.memory_space<vmem>>, vector<1x256xf32>
    %17 = vector.broadcast %16 : vector<1x256xf32> to vector<8x256xf32>
    %18 = arith.addf %15, %17 : vector<8x256xf32>
    %cst_16 = arith.constant 0.000000e+00 : f32
    %19 = vector.broadcast %cst_16 : f32 to vector<8x256xf32>
    %20 = arith.maximumf %18, %19 : vector<8x256xf32>
    %c0_17 = arith.constant 0 : index
    %c0_18 = arith.constant 0 : index
    %21 = vector.load %arg8[%c0_17, %c0_18] : memref<256x128xf32, #tpu.memory_space<vmem>>, vector<256x128xf32>
    %cst_19 = arith.constant dense<0.000000e+00> : vector<8x128xf32>
    %22 = tpu.matmul %20, %21, %cst_19 {dimension_numbers = #tpu.dot_dimension_numbers<[1], [0], [0], [1], [0, 0, 1, 1], [], []>} : vector<8x256xf32>, vector<256x128xf32>, vector<8x128xf32> -> vector<8x128xf32>
    %c0_20 = arith.constant 0 : index
    %c0_21 = arith.constant 0 : index
    %23 = vector.load %arg9[%c0_20, %c0_21] : memref<1x128xf32, #tpu.memory_space<vmem>>, vector<1x128xf32>
    %24 = vector.broadcast %23 : vector<1x128xf32> to vector<8x128xf32>
    %25 = arith.addf %22, %24 : vector<8x128xf32>
    %26 = vector.extract_strided_slice %10 {offsets = [0, 256], sizes = [8, 256], strides = [1, 1]} : vector<8x512xf32> to vector<8x256xf32>
    %c0_22 = arith.constant 0 : index
    %c0_23 = arith.constant 0 : index
    %27 = vector.load %arg10[%c0_22, %c0_23] : memref<128x256xf32, #tpu.memory_space<vmem>>, vector<128x256xf32>
    %cst_24 = arith.constant dense<0.000000e+00> : vector<8x256xf32>
    %28 = tpu.matmul %25, %27, %cst_24 {dimension_numbers = #tpu.dot_dimension_numbers<[1], [0], [0], [1], [0, 0, 1, 1], [], []>} : vector<8x128xf32>, vector<128x256xf32>, vector<8x256xf32> -> vector<8x256xf32>
    %29 = arith.addf %26, %28 : vector<8x256xf32>
    %cst_25 = arith.constant 0.000000e+00 : f32
    %30 = vector.broadcast %cst_25 : f32 to vector<8x256xf32>
    %31 = arith.maximumf %29, %30 : vector<8x256xf32>
    %c0_26 = arith.constant 0 : index
    %c0_27 = arith.constant 0 : index
    %32 = vector.load %arg11[%c0_26, %c0_27] : memref<256x256xf32, #tpu.memory_space<vmem>>, vector<256x256xf32>
    %cst_28 = arith.constant dense<0.000000e+00> : vector<8x256xf32>
    %33 = tpu.matmul %31, %32, %cst_28 {dimension_numbers = #tpu.dot_dimension_numbers<[1], [0], [0], [1], [0, 0, 1, 1], [], []>} : vector<8x256xf32>, vector<256x256xf32>, vector<8x256xf32> -> vector<8x256xf32>
    %c0_29 = arith.constant 0 : index
    %c0_30 = arith.constant 0 : index
    %34 = vector.load %arg12[%c0_29, %c0_30] : memref<1x256xf32, #tpu.memory_space<vmem>>, vector<1x256xf32>
    %35 = vector.broadcast %34 : vector<1x256xf32> to vector<8x256xf32>
    %36 = arith.addf %33, %35 : vector<8x256xf32>
    %cst_31 = arith.constant 0.000000e+00 : f32
    %37 = vector.broadcast %cst_31 : f32 to vector<8x256xf32>
    %38 = arith.maximumf %36, %37 : vector<8x256xf32>
    %c0_32 = arith.constant 0 : index
    %c0_33 = arith.constant 0 : index
    %39 = vector.load %arg13[%c0_32, %c0_33] : memref<256x128xf32, #tpu.memory_space<vmem>>, vector<256x128xf32>
    %cst_34 = arith.constant dense<0.000000e+00> : vector<8x128xf32>
    %40 = tpu.matmul %38, %39, %cst_34 {dimension_numbers = #tpu.dot_dimension_numbers<[1], [0], [0], [1], [0, 0, 1, 1], [], []>} : vector<8x256xf32>, vector<256x128xf32>, vector<8x128xf32> -> vector<8x128xf32>
    %c0_35 = arith.constant 0 : index
    %c0_36 = arith.constant 0 : index
    %41 = vector.load %arg14[%c0_35, %c0_36] : memref<1x128xf32, #tpu.memory_space<vmem>>, vector<1x128xf32>
    %42 = vector.broadcast %41 : vector<1x128xf32> to vector<8x128xf32>
    %43 = arith.addf %40, %42 : vector<8x128xf32>
    %c0_37 = arith.constant 0 : index
    %c0_38 = arith.constant 0 : index
    %44 = vector.load %arg15[%c0_37, %c0_38] : memref<8x128xf32, #tpu.memory_space<vmem>>, vector<8x128xf32>
    tpu.vector_store %arg15[%c0_37, %c0_38], %25 {strides = array<i32>} : memref<8x128xf32, #tpu.memory_space<vmem>>, vector<8x128xf32>,
    %c0_39 = arith.constant 0 : index
    %c0_40 = arith.constant 0 : index
    %45 = vector.load %arg16[%c0_39, %c0_40] : memref<8x128xf32, #tpu.memory_space<vmem>>, vector<8x128xf32>
    tpu.vector_store %arg16[%c0_39, %c0_40], %43 {strides = array<i32>} : memref<8x128xf32, #tpu.memory_space<vmem>>, vector<8x128xf32>,
    return
  }
  func.func @transform_0(%arg0: i32) -> (i32, i32) {
    %c0_i32 = arith.constant 0 : i32
    %c0_i32_0 = arith.constant 0 : i32
    return %arg0, %c0_i32 : i32, i32
  }
  func.func @transform_1(%arg0: i32) -> (i32, i32) {
    %c0_i32 = arith.constant 0 : i32
    %c0_i32_0 = arith.constant 0 : i32
    %c0_i32_1 = arith.constant 0 : i32
    return %c0_i32, %c0_i32_0 : i32, i32
  }
  func.func @transform_2(%arg0: i32) -> (i32, i32) {
    %c0_i32 = arith.constant 0 : i32
    %c0_i32_0 = arith.constant 0 : i32
    %c0_i32_1 = arith.constant 0 : i32
    return %c0_i32, %c0_i32_0 : i32, i32
  }
  func.func @transform_3(%arg0: i32) -> (i32, i32) {
    %c0_i32 = arith.constant 0 : i32
    %c0_i32_0 = arith.constant 0 : i32
    %c0_i32_1 = arith.constant 0 : i32
    return %c0_i32, %c0_i32_0 : i32, i32
  }
  func.func @transform_4(%arg0: i32) -> (i32, i32) {
    %c0_i32 = arith.constant 0 : i32
    %c0_i32_0 = arith.constant 0 : i32
    %c0_i32_1 = arith.constant 0 : i32
    return %c0_i32, %c0_i32_0 : i32, i32
  }
  func.func @transform_5(%arg0: i32) -> (i32, i32) {
    %c0_i32 = arith.constant 0 : i32
    %c0_i32_0 = arith.constant 0 : i32
    %c0_i32_1 = arith.constant 0 : i32
    return %c0_i32, %c0_i32_0 : i32, i32
  }
  func.func @transform_6(%arg0: i32) -> (i32, i32) {
    %c0_i32 = arith.constant 0 : i32
    %c0_i32_0 = arith.constant 0 : i32
    %c0_i32_1 = arith.constant 0 : i32
    return %c0_i32, %c0_i32_0 : i32, i32
  }
  func.func @transform_7(%arg0: i32) -> (i32, i32) {
    %c0_i32 = arith.constant 0 : i32
    %c0_i32_0 = arith.constant 0 : i32
    %c0_i32_1 = arith.constant 0 : i32
    return %c0_i32, %c0_i32_0 : i32, i32
  }
  func.func @transform_8(%arg0: i32) -> (i32, i32) {
    %c0_i32 = arith.constant 0 : i32
    %c0_i32_0 = arith.constant 0 : i32
    %c0_i32_1 = arith.constant 0 : i32
    return %c0_i32, %c0_i32_0 : i32, i32
  }
  func.func @transform_9(%arg0: i32) -> (i32, i32) {
    %c0_i32 = arith.constant 0 : i32
    %c0_i32_0 = arith.constant 0 : i32
    %c0_i32_1 = arith.constant 0 : i32
    return %c0_i32, %c0_i32_0 : i32, i32
  }
  func.func @transform_10(%arg0: i32) -> (i32, i32) {
    %c0_i32 = arith.constant 0 : i32
    %c0_i32_0 = arith.constant 0 : i32
    %c0_i32_1 = arith.constant 0 : i32
    return %c0_i32, %c0_i32_0 : i32, i32
  }
  func.func @transform_11(%arg0: i32) -> (i32, i32) {
    %c0_i32 = arith.constant 0 : i32
    %c0_i32_0 = arith.constant 0 : i32
    %c0_i32_1 = arith.constant 0 : i32
    return %c0_i32, %c0_i32_0 : i32, i32
  }
  func.func @transform_12(%arg0: i32) -> (i32, i32) {
    %c0_i32 = arith.constant 0 : i32
    %c0_i32_0 = arith.constant 0 : i32
    %c0_i32_1 = arith.constant 0 : i32
    return %c0_i32, %c0_i32_0 : i32, i32
  }
  func.func @transform_13(%arg0: i32) -> (i32, i32) {
    %c0_i32 = arith.constant 0 : i32
    %c0_i32_0 = arith.constant 0 : i32
    %c0_i32_1 = arith.constant 0 : i32
    return %c0_i32, %c0_i32_0 : i32, i32
  }
  func.func @transform_14(%arg0: i32) -> (i32, i32) {
    %c0_i32 = arith.constant 0 : i32
    %c0_i32_0 = arith.constant 0 : i32
    return %arg0, %c0_i32 : i32, i32
  }
  func.func @transform_15(%arg0: i32) -> (i32, i32) {
    %c0_i32 = arith.constant 0 : i32
    %c0_i32_0 = arith.constant 0 : i32
    return %arg0, %c0_i32 : i32, i32
  }
}

</mosaic_0001>

<llo_original>
// kernel: demo_model_forward.1
$region0: #{demo_model_forward.1}
  #allocation0 [shape = 'u32[]', space=smem, size = 0x4, offset = 0x4, fixed_abs, tag = 'smem constant byte address 0x4 - core index']
  #allocation1 [shape = 'u32[144,128]{1,0:T(1,128)}', space=vmem, size = 0x12000, scoped, tag = 'internal scratch']
  %s0 = inlined_call_operand.vmem [shape: f32[8,128], index: 0, kind: input, shape index: {}]
  %s1 = inlined_call_operand.hbm [shape: f32[128,1024], index: 1, kind: input, shape index: {}]
  %s2 = inlined_call_operand.hbm [shape: f32[1,1024], index: 2, kind: input, shape index: {}]
  %s3 = inlined_call_operand.hbm [shape: f32[1024,512], index: 3, kind: input, shape index: {}]
  %s4 = inlined_call_operand.hbm [shape: f32[1,512], index: 4, kind: input, shape index: {}]
  %s5 = inlined_call_operand.hbm [shape: f32[256,256], index: 5, kind: input, shape index: {}]
  %s6 = inlined_call_operand.hbm [shape: f32[1,256], index: 6, kind: input, shape index: {}]
  %s7 = inlined_call_operand.hbm [shape: f32[256,128], index: 7, kind: input, shape index: {}]
  %s8 = inlined_call_operand.hbm [shape: f32[1,128], index: 8, kind: input, shape index: {}]
  %s9 = inlined_call_operand.hbm [shape: f32[128,256], index: 9, kind: input, shape index: {}]
  %s10 = inlined_call_operand.hbm [shape: f32[256,256], index: 10, kind: input, shape index: {}]
  %s11 = inlined_call_operand.hbm [shape: f32[1,256], index: 11, kind: input, shape index: {}]
  %s12 = inlined_call_operand.hbm [shape: f32[256,128], index: 12, kind: input, shape index: {}]
  %s13 = inlined_call_operand.hbm [shape: f32[1,128], index: 13, kind: input, shape index: {}]
  %s14 = inlined_call_operand.vmem [shape: f32[8,128], index: 14, kind: output, shape index: {0}]
  %s15 = inlined_call_operand.vmem [shape: f32[8,128], index: 15, kind: output, shape index: {1}]
  %16 = xla_tuple %s14, %s15
  %s17 = sld [smem:[#allocation0]]
  $region126: #{demo_model_forward.1} parent=0
    _
  %s19 = ssub.s32 1, %s17
  %s20 = scalar_select 0, %s19, %s17
  $region1: #{demo_model_forward.1} parent=0
    #allocation2 [shape = 'u8[524288]{0}', space=vmem, size = 0x80000, scoped, tag = 'input window, operand 1, single buffered']
    #allocation3 [shape = 's32[1]{0}', space=sflag, size = 0x4, scoped, tag = 'scoped memory for demo_model_forward.1']
    #allocation4 [shape = 'u8[4096]{0}', space=vmem, size = 0x1000, scoped, tag = 'input window, operand 2, single buffered']
    #allocation5 [shape = 's32[1]{0}', space=sflag, size = 0x4, scoped, tag = 'scoped memory for demo_model_forward.1']
    #allocation6 [shape = 'u8[2097152]{0}', space=vmem, size = 0x200000, scoped, tag = 'input window, operand 3, single buffered']
    #allocation7 [shape = 'u8[2048]{0}', space=vmem, size = 0x800, scoped, tag = 'input window, operand 4, single buffered']
    #allocation8 [shape = 's32[1]{0}', space=sflag, size = 0x4, scoped, tag = 'scoped memory for demo_model_forward.1']
    #allocation9 [shape = 'u8[262144]{0}', space=vmem, size = 0x40000, scoped, tag = 'input window, operand 5, single buffered']
    #allocation10 [shape = 'u8[1024]{0}', space=vmem, size = 0x400, scoped, tag = 'input window, operand 6, single buffered']
    #allocation11 [shape = 's32[1]{0}', space=sflag, size = 0x4, scoped, tag = 'scoped memory for demo_model_forward.1']
    #allocation12 [shape = 'u8[131072]{0}', space=vmem, size = 0x20000, scoped, tag = 'input window, operand 7, single buffered']
    #allocation13 [shape = 'u8[512]{0}', space=vmem, size = 0x400, scoped, tag = 'input window, operand 8, single buffered']
    #allocation14 [shape = 's32[1]{0}', space=sflag, size = 0x4, scoped, tag = 'scoped memory for demo_model_forward.1']
    #allocation15 [shape = 'u8[131072]{0}', space=vmem, size = 0x20000, scoped, tag = 'input window, operand 9, single buffered']
    #allocation16 [shape = 'u8[262144]{0}', space=vmem, size = 0x40000, scoped, tag = 'input window, operand 10, single buffered']
    #allocation17 [shape = 's32[1]{0}', space=sflag, size = 0x4, scoped, tag = 'scoped memory for demo_model_forward.1']
    #allocation18 [shape = 'u8[1024]{0}', space=vmem, size = 0x400, scoped, tag = 'input window, operand 11, single buffered']
    #allocation19 [shape = 'u8[131072]{0}', space=vmem, size = 0x20000, scoped, tag = 'input window, operand 12, single buffered']
    #allocation20 [shape = 's32[1]{0}', space=sflag, size = 0x4, scoped, tag = 'scoped memory for demo_model_forward.1']
    #allocation21 [shape = 'u8[512]{0}', space=vmem, size = 0x400, scoped, tag = 'input window, operand 13, single buffered']
    %21 = vsyncpa [#allocation3], 0
    %22 = vsyncpa [#allocation5], 0
    %23 = vsyncpa [#allocation8], 0
    %24 = vsyncpa [#allocation11], 0
    %25 = vsyncpa [#allocation14], 0
    %26 = vsyncpa [#allocation17], 0
    %27 = vsyncpa [#allocation20], 0
    // Predicated region
    $region2: #{demo_model_forward.1} parent=1 // pred_check
      _
    $region3: #{demo_model_forward.1} parent=1 // pred_check_branch
      %29 = sbr.rel (0) target = $region5
    $region4: #{demo_model_forward.1} parent=1 // pred_region
      _
    $region5: #{demo_model_forward.1} parent=1 // pred_fallthru
      _
    // Predicated region
    $region6: #{demo_model_forward.1} parent=1 // pred_check
      _
    $region7: #{demo_model_forward.1} parent=1 // pred_check_branch
      %31 = sbr.rel (0) target = $region9
    $region8: #{demo_model_forward.1} parent=1 // pred_region
      %s33 = ssub.s32 16384, 16384
      %34 = vsyncadd [#allocation3], %s33
      %s35 = sshll.u32 [#allocation2], 4
      %s36 = int_to_ptr.vmem [resolvable:$true] %s35
      %41 = dma.hbm_to_vmem [thread:$0]  %s1, 16384, %s36, [#allocation3], 1024, 1024, 64
    $region9: #{demo_model_forward.1} parent=1 // pred_fallthru
      _
    // Predicated region
    $region10: #{demo_model_forward.1} parent=1 // pred_check
      _
    $region11: #{demo_model_forward.1} parent=1 // pred_check_branch
      %43 = sbr.rel (0) target = $region13
    $region12: #{demo_model_forward.1} parent=1 // pred_region
      %s45 = ssub.s32 128, 128
      %46 = vsyncadd [#allocation5], %s45
      %s48 = sshll.u32 [#allocation4], 4
      %s49 = int_to_ptr.vmem [resolvable:$true] %s48
      %51 = dma.hbm_to_vmem [thread:$0]  %s2, 128, %s49, [#allocation5]
    $region13: #{demo_model_forward.1} parent=1 // pred_fallthru
      _
    // Predicated region
    $region14: #{demo_model_forward.1} parent=1 // pred_check
      _
    $region15: #{demo_model_forward.1} parent=1 // pred_check_branch
      %53 = sbr.rel (0) target = $region17
    $region16: #{demo_model_forward.1} parent=1 // pred_region
      %s55 = ssub.s32 65536, 65536
      %56 = vsyncadd [#allocation5], %s55
      %s57 = sshll.u32 [#allocation6], 4
      %s58 = int_to_ptr.vmem [resolvable:$true] %s57
      %63 = dma.hbm_to_vmem [thread:$0]  %s3, 65536, %s58, [#allocation5], 512, 512, 32
    $region17: #{demo_model_forward.1} parent=1 // pred_fallthru
      _
    // Predicated region
    $region18: #{demo_model_forward.1} parent=1 // pred_check
      _
    $region19: #{demo_model_forward.1} parent=1 // pred_check_branch
      %65 = sbr.rel (0) target = $region21
    $region20: #{demo_model_forward.1} parent=1 // pred_region
      %s67 = ssub.s32 64, 64
      %68 = vsyncadd [#allocation8], %s67
      %s70 = sshll.u32 [#allocation7], 4
      %s71 = int_to_ptr.vmem [resolvable:$true] %s70
      %73 = dma.hbm_to_vmem [thread:$0]  %s4, 64, %s71, [#allocation8]
    $region21: #{demo_model_forward.1} parent=1 // pred_fallthru
      _
    // Predicated region
    $region22: #{demo_model_forward.1} parent=1 // pred_check
      _
    $region23: #{demo_model_forward.1} parent=1 // pred_check_branch
      %75 = sbr.rel (0) target = $region25
    $region24: #{demo_model_forward.1} parent=1 // pred_region
      %s77 = ssub.s32 8192, 8192
      %78 = vsyncadd [#allocation8], %s77
      %s79 = sshll.u32 [#allocation9], 4
      %s80 = int_to_ptr.vmem [resolvable:$true] %s79
      %85 = dma.hbm_to_vmem [thread:$0]  %s5, 8192, %s80, [#allocation8], 256, 256, 16
    $region25: #{demo_model_forward.1} parent=1 // pred_fallthru
      _
    // Predicated region
    $region26: #{demo_model_forward.1} parent=1 // pred_check
      _
    $region27: #{demo_model_forward.1} parent=1 // pred_check_branch
      %87 = sbr.rel (0) target = $region29
    $region28: #{demo_model_forward.1} parent=1 // pred_region
      %s89 = ssub.s32 32, 32
      %90 = vsyncadd [#allocation11], %s89
      %s92 = sshll.u32 [#allocation10], 4
      %s93 = int_to_ptr.vmem [resolvable:$true] %s92
      %95 = dma.hbm_to_vmem [thread:$0]  %s6, 32, %s93, [#allocation11]
    $region29: #{demo_model_forward.1} parent=1 // pred_fallthru
      _
    // Predicated region
    $region30: #{demo_model_forward.1} parent=1 // pred_check
      _
    $region31: #{demo_model_forward.1} parent=1 // pred_check_branch
      %97 = sbr.rel (0) target = $region33
    $region32: #{demo_model_forward.1} parent=1 // pred_region
      %s99 = ssub.s32 4096, 4096
      %100 = vsyncadd [#allocation11], %s99
      %s101 = sshll.u32 [#allocation12], 4
      %s102 = int_to_ptr.vmem [resolvable:$true] %s101
      %107 = dma.hbm_to_vmem [thread:$0]  %s7, 4096, %s102, [#allocation11], 128, 128, 8
    $region33: #{demo_model_forward.1} parent=1 // pred_fallthru
      _
    // Predicated region
    $region34: #{demo_model_forward.1} parent=1 // pred_check
      _
    $region35: #{demo_model_forward.1} parent=1 // pred_check_branch
      %109 = sbr.rel (0) target = $region37
    $region36: #{demo_model_forward.1} parent=1 // pred_region
      %s111 = ssub.s32 16, 16
      %112 = vsyncadd [#allocation14], %s111
      %s114 = sshll.u32 [#allocation13], 4
      %s115 = int_to_ptr.vmem [resolvable:$true] %s114
      %117 = dma.hbm_to_vmem [thread:$0]  %s8, 16, %s115, [#allocation14]
    $region37: #{demo_model_forward.1} parent=1 // pred_fallthru
      _
    // Predicated region
    $region38: #{demo_model_forward.1} parent=1 // pred_check
      _
    $region39: #{demo_model_forward.1} parent=1 // pred_check_branch
      %119 = sbr.rel (0) target = $region41
    $region40: #{demo_model_forward.1} parent=1 // pred_region
      %s121 = ssub.s32 4096, 4096
      %122 = vsyncadd [#allocation14], %s121
      %s123 = sshll.u32 [#allocation15], 4
      %s124 = int_to_ptr.vmem [resolvable:$true] %s123
      %129 = dma.hbm_to_vmem [thread:$0]  %s9, 4096, %s124, [#allocation14], 256, 256, 16
    $region41: #{demo_model_forward.1} parent=1 // pred_fallthru
      _
    // Predicated region
    $region42: #{demo_model_forward.1} parent=1 // pred_check
      _
    $region43: #{demo_model_forward.1} parent=1 // pred_check_branch
      %131 = sbr.rel (0) target = $region45
    $region44: #{demo_model_forward.1} parent=1 // pred_region
      %s133 = ssub.s32 8192, 8192
      %134 = vsyncadd [#allocation17], %s133
      %s135 = sshll.u32 [#allocation16], 4
      %s136 = int_to_ptr.vmem [resolvable:$true] %s135
      %141 = dma.hbm_to_vmem [thread:$0]  %s10, 8192, %s136, [#allocation17], 256, 256, 16
    $region45: #{demo_model_forward.1} parent=1 // pred_fallthru
      _
    // Predicated region
    $region46: #{demo_model_forward.1} parent=1 // pred_check
      _
    $region47: #{demo_model_forward.1} parent=1 // pred_check_branch
      %143 = sbr.rel (0) target = $region49
    $region48: #{demo_model_forward.1} parent=1 // pred_region
      %s145 = ssub.s32 32, 32
      %146 = vsyncadd [#allocation17], %s145
      %s148 = sshll.u32 [#allocation18], 4
      %s149 = int_to_ptr.vmem [resolvable:$true] %s148
      %151 = dma.hbm_to_vmem [thread:$0]  %s11, 32, %s149, [#allocation17]
    $region49: #{demo_model_forward.1} parent=1 // pred_fallthru
      _
    // Predicated region
    $region50: #{demo_model_forward.1} parent=1 // pred_check
      _
    $region51: #{demo_model_forward.1} parent=1 // pred_check_branch
      %153 = sbr.rel (0) target = $region53
    $region52: #{demo_model_forward.1} parent=1 // pred_region
      %s155 = ssub.s32 4096, 4096
      %156 = vsyncadd [#allocation20], %s155
      %s157 = sshll.u32 [#allocation19], 4
      %s158 = int_to_ptr.vmem [resolvable:$true] %s157
      %163 = dma.hbm_to_vmem [thread:$0]  %s12, 4096, %s158, [#allocation20], 128, 128, 8
    $region53: #{demo_model_forward.1} parent=1 // pred_fallthru
      _
    // Predicated region
    $region54: #{demo_model_forward.1} parent=1 // pred_check
      _
    $region55: #{demo_model_forward.1} parent=1 // pred_check_branch
      %165 = sbr.rel (0) target = $region57
    $region56: #{demo_model_forward.1} parent=1 // pred_region
      %s167 = ssub.s32 16, 16
      %168 = vsyncadd [#allocation20], %s167
      %s170 = sshll.u32 [#allocation21], 4
      %s171 = int_to_ptr.vmem [resolvable:$true] %s170
      %173 = dma.hbm_to_vmem [thread:$0]  %s13, 16, %s171, [#allocation20]
    $region57: #{demo_model_forward.1} parent=1 // pred_fallthru
      _
    // Predicated region
    $region58: #{demo_model_forward.1} parent=1 // pred_check
      _
    $region59: #{demo_model_forward.1} parent=1 // pred_check_branch
      %175 = sbr.rel (0) target = $region61
    $region60: #{demo_model_forward.1} parent=1 // pred_region
      %176 = dma.done [#allocation3], 16384
    $region61: #{demo_model_forward.1} parent=1 // pred_fallthru
      _
    // Predicated region
    $region62: #{demo_model_forward.1} parent=1 // pred_check
      _
    $region63: #{demo_model_forward.1} parent=1 // pred_check_branch
      %178 = sbr.rel (0) target = $region65
    $region64: #{demo_model_forward.1} parent=1 // pred_region
      %179 = dma.done [#allocation5], 128
    $region65: #{demo_model_forward.1} parent=1 // pred_fallthru
      _
    // Predicated region
    $region66: #{demo_model_forward.1} parent=1 // pred_check
      _
    $region67: #{demo_model_forward.1} parent=1 // pred_check_branch
      %181 = sbr.rel (0) target = $region69
    $region68: #{demo_model_forward.1} parent=1 // pred_region
      %182 = dma.done [#allocation5], 65536
    $region69: #{demo_model_forward.1} parent=1 // pred_fallthru
      _
    // Predicated region
    $region70: #{demo_model_forward.1} parent=1 // pred_check
      _
    $region71: #{demo_model_forward.1} parent=1 // pred_check_branch
      %184 = sbr.rel (0) target = $region73
    $region72: #{demo_model_forward.1} parent=1 // pred_region
      %185 = dma.done [#allocation8], 64
    $region73: #{demo_model_forward.1} parent=1 // pred_fallthru
      _
    // Predicated region
    $region74: #{demo_model_forward.1} parent=1 // pred_check
      _
    $region75: #{demo_model_forward.1} parent=1 // pred_check_branch
      %187 = sbr.rel (0) target = $region77
    $region76: #{demo_model_forward.1} parent=1 // pred_region
      %188 = dma.done [#allocation8], 8192
    $region77: #{demo_model_forward.1} parent=1 // pred_fallthru
      _
    // Predicated region
    $region78: #{demo_model_forward.1} parent=1 // pred_check
      _
    $region79: #{demo_model_forward.1} parent=1 // pred_check_branch
      %190 = sbr.rel (0) target = $region81
    $region80: #{demo_model_forward.1} parent=1 // pred_region
      %191 = dma.done [#allocation11], 32
    $region81: #{demo_model_forward.1} parent=1 // pred_fallthru
      _
    // Predicated region
    $region82: #{demo_model_forward.1} parent=1 // pred_check
      _
    $region83: #{demo_model_forward.1} parent=1 // pred_check_branch
      %193 = sbr.rel (0) target = $region85
    $region84: #{demo_model_forward.1} parent=1 // pred_region
      %194 = dma.done [#allocation11], 4096
    $region85: #{demo_model_forward.1} parent=1 // pred_fallthru
      _
    // Predicated region
    $region86: #{demo_model_forward.1} parent=1 // pred_check
      _
    $region87: #{demo_model_forward.1} parent=1 // pred_check_branch
      %196 = sbr.rel (0) target = $region89
    $region88: #{demo_model_forward.1} parent=1 // pred_region
      %197 = dma.done [#allocation14], 16
    $region89: #{demo_model_forward.1} parent=1 // pred_fallthru
      _
    // Predicated region
    $region90: #{demo_model_forward.1} parent=1 // pred_check
      _
    $region91: #{demo_model_forward.1} parent=1 // pred_check_branch
      %199 = sbr.rel (0) target = $region93
    $region92: #{demo_model_forward.1} parent=1 // pred_region
      %200 = dma.done [#allocation14], 4096
    $region93: #{demo_model_forward.1} parent=1 // pred_fallthru
      _
    // Predicated region
    $region94: #{demo_model_forward.1} parent=1 // pred_check
      _
    $region95: #{demo_model_forward.1} parent=1 // pred_check_branch
      %202 = sbr.rel (0) target = $region97
    $region96: #{demo_model_forward.1} parent=1 // pred_region
      %203 = dma.done [#allocation17], 8192
    $region97: #{demo_model_forward.1} parent=1 // pred_fallthru
      _
    // Predicated region
    $region98: #{demo_model_forward.1} parent=1 // pred_check
      _
    $region99: #{demo_model_forward.1} parent=1 // pred_check_branch
      %205 = sbr.rel (0) target = $region101
    $region100: #{demo_model_forward.1} parent=1 // pred_region
      %206 = dma.done [#allocation17], 32
    $region101: #{demo_model_forward.1} parent=1 // pred_fallthru
      _
    // Predicated region
    $region102: #{demo_model_forward.1} parent=1 // pred_check
      _
    $region103: #{demo_model_forward.1} parent=1 // pred_check_branch
      %208 = sbr.rel (0) target = $region105
    $region104: #{demo_model_forward.1} parent=1 // pred_region
      %209 = dma.done [#allocation20], 4096
    $region105: #{demo_model_forward.1} parent=1 // pred_fallthru
      _
    // Predicated region
    $region106: #{demo_model_forward.1} parent=1 // pred_check
      _
    $region107: #{demo_model_forward.1} parent=1 // pred_check_branch
      %211 = sbr.rel (0) target = $region109
    $region108: #{demo_model_forward.1} parent=1 // pred_region
      %212 = dma.done [#allocation20], 16
    $region109: #{demo_model_forward.1} parent=1 // pred_fallthru
      _
    %v213 = vld [vmem:[%s0] sm:$0xff]
    %v214 = vld [vmem:[#allocation2] sm:$0xff]
    %v215 = vld [vmem:[#allocation2 + $0x8] sm:$0xff]
    %v216 = vld [vmem:[#allocation2 + $0x10] sm:$0xff]
    %v217 = vld [vmem:[#allocation2 + $0x18] sm:$0xff]
    %v218 = vld [vmem:[#allocation2 + $0x20] sm:$0xff]
    %v219 = vld [vmem:[#allocation2 + $0x28] sm:$0xff]
    %v220 = vld [vmem:[#allocation2 + $0x30] sm:$0xff]
    %v221 = vld [vmem:[#allocation2 + $0x38] sm:$0xff]
    %v222 = vld [vmem:[#allocation2 + $0x40] sm:$0xff]
    %v223 = vld [vmem:[#allocation2 + $0x48] sm:$0xff]
    %v224 = vld [vmem:[#allocation2 + $0x50] sm:$0xff]
    %v225 = vld [vmem:[#allocation2 + $0x58] sm:$0xff]
    %v226 = vld [vmem:[#allocation2 + $0x60] sm:$0xff]
    %v227 = vld [vmem:[#allocation2 + $0x68] sm:$0xff]
    %v228 = vld [vmem:[#allocation2 + $0x70] sm:$0xff]
    %v229 = vld [vmem:[#allocation2 + $0x78] sm:$0xff]
    %v230 = vld [vmem:[#allocation2 + $0x80] sm:$0xff]
    %v231 = vld [vmem:[#allocation2 + $0x88] sm:$0xff]
    %v232 = vld [vmem:[#allocation2 + $0x90] sm:$0xff]
    %v233 = vld [vmem:[#allocation2 + $0x98] sm:$0xff]
    %v234 = vld [vmem:[#allocation2 + $0xa0] sm:$0xff]
    %v235 = vld [vmem:[#allocation2 + $0xa8] sm:$0xff]
    %v236 = vld [vmem:[#allocation2 + $0xb0] sm:$0xff]
    %v237 = vld [vmem:[#allocation2 + $0xb8] sm:$0xff]
    %v238 = vld [vmem:[#allocation2 + $0xc0] sm:$0xff]
    %v239 = vld [vmem:[#allocation2 + $0xc8] sm:$0xff]
    %v240 = vld [vmem:[#allocation2 + $0xd0] sm:$0xff]
    %v241 = vld [vmem:[#allocation2 + $0xd8] sm:$0xff]
    %v242 = vld [vmem:[#allocation2 + $0xe0] sm:$0xff]
    %v243 = vld [vmem:[#allocation2 + $0xe8] sm:$0xff]
    %v244 = vld [vmem:[#allocation2 + $0xf0] sm:$0xff]
    %v245 = vld [vmem:[#allocation2 + $0xf8] sm:$0xff]
    %v246 = vld [vmem:[#allocation2 + $0x100] sm:$0xff]
    %v247 = vld [vmem:[#allocation2 + $0x108] sm:$0xff]
    %v248 = vld [vmem:[#allocation2 + $0x110] sm:$0xff]
    %v249 = vld [vmem:[#allocation2 + $0x118] sm:$0xff]
    %v250 = vld [vmem:[#allocation2 + $0x120] sm:$0xff]
    %v251 = vld [vmem:[#allocation2 + $0x128] sm:$0xff]
    %v252 = vld [vmem:[#allocation2 + $0x130] sm:$0xff]
    %v253 = vld [vmem:[#allocation2 + $0x138] sm:$0xff]
    %v254 = vld [vmem:[#allocation2 + $0x140] sm:$0xff]
    %v255 = vld [vmem:[#allocation2 + $0x148] sm:$0xff]
    %v256 = vld [vmem:[#allocation2 + $0x150] sm:$0xff]
    %v257 = vld [vmem:[#allocation2 + $0x158] sm:$0xff]
    %v258 = vld [vmem:[#allocation2 + $0x160] sm:$0xff]
    %v259 = vld [vmem:[#allocation2 + $0x168] sm:$0xff]
    %v260 = vld [vmem:[#allocation2 + $0x170] sm:$0xff]
    %v261 = vld [vmem:[#allocation2 + $0x178] sm:$0xff]
    %v262 = vld [vmem:[#allocation2 + $0x180] sm:$0xff]
    %v263 = vld [vmem:[#allocation2 + $0x188] sm:$0xff]
    %v264 = vld [vmem:[#allocation2 + $0x190] sm:$0xff]
    %v265 = vld [vmem:[#allocation2 + $0x198] sm:$0xff]
    %v266 = vld [vmem:[#allocation2 + $0x1a0] sm:$0xff]
    %v267 = vld [vmem:[#allocation2 + $0x1a8] sm:$0xff]
    %v268 = vld [vmem:[#allocation2 + $0x1b0] sm:$0xff]
    %v269 = vld [vmem:[#allocation2 + $0x1b8] sm:$0xff]
    %v270 = vld [vmem:[#allocation2 + $0x1c0] sm:$0xff]
    %v271 = vld [vmem:[#allocation2 + $0x1c8] sm:$0xff]
    %v272 = vld [vmem:[#allocation2 + $0x1d0] sm:$0xff]
    %v273 = vld [vmem:[#allocation2 + $0x1d8] sm:$0xff]
    %v274 = vld [vmem:[#allocation2 + $0x1e0] sm:$0xff]
    %v275 = vld [vmem:[#allocation2 + $0x1e8] sm:$0xff]
    %v276 = vld [vmem:[#allocation2 + $0x1f0] sm:$0xff]
    %v277 = vld [vmem:[#allocation2 + $0x1f8] sm:$0xff]
    %v278 = vld [vmem:[#allocation2 + $0x200] sm:$0xff]
    %v279 = vld [vmem:[#allocation2 + $0x208] sm:$0xff]
    %v280 = vld [vmem:[#allocation2 + $0x210] sm:$0xff]
    %v281 = vld [vmem:[#allocation2 + $0x218] sm:$0xff]
    %v282 = vld [vmem:[#allocation2 + $0x220] sm:$0xff]
    %v283 = vld [vmem:[#allocation2 + $0x228] sm:$0xff]
    %v284 = vld [vmem:[#allocation2 + $0x230] sm:$0xff]
    %v285 = vld [vmem:[#allocation2 + $0x238] sm:$0xff]
    %v286 = vld [vmem:[#allocation2 + $0x240] sm:$0xff]
    %v287 = vld [vmem:[#allocation2 + $0x248] sm:$0xff]
    %v288 = vld [vmem:[#allocation2 + $0x250] sm:$0xff]
    %v289 = vld [vmem:[#allocation2 + $0x258] sm:$0xff]
    %v290 = vld [vmem:[#allocation2 + $0x260] sm:$0xff]
    %v291 = vld [vmem:[#allocation2 + $0x268] sm:$0xff]
    %v292 = vld [vmem:[#allocation2 + $0x270] sm:$0xff]
    %v293 = vld [vmem:[#allocation2 + $0x278] sm:$0xff]
    %v294 = vld [vmem:[#allocation2 + $0x280] sm:$0xff]
    %v295 = vld [vmem:[#allocation2 + $0x288] sm:$0xff]
    %v296 = vld [vmem:[#allocation2 + $0x290] sm:$0xff]
    %v297 = vld [vmem:[#allocation2 + $0x298] sm:$0xff]
    %v298 = vld [vmem:[#allocation2 + $0x2a0] sm:$0xff]
    %v299 = vld [vmem:[#allocation2 + $0x2a8] sm:$0xff]
    %v300 = vld [vmem:[#allocation2 + $0x2b0] sm:$0xff]
    %v301 = vld [vmem:[#allocation2 + $0x2b8] sm:$0xff]
    %v302 = vld [vmem:[#allocation2 + $0x2c0] sm:$0xff]
    %v303 = vld [vmem:[#allocation2 + $0x2c8] sm:$0xff]
    %v304 = vld [vmem:[#allocation2 + $0x2d0] sm:$0xff]
    %v305 = vld [vmem:[#allocation2 + $0x2d8] sm:$0xff]
    %v306 = vld [vmem:[#allocation2 + $0x2e0] sm:$0xff]
    %v307 = vld [vmem:[#allocation2 + $0x2e8] sm:$0xff]
    %v308 = vld [vmem:[#allocation2 + $0x2f0] sm:$0xff]
    %v309 = vld [vmem:[#allocation2 + $0x2f8] sm:$0xff]
    %v310 = vld [vmem:[#allocation2 + $0x300] sm:$0xff]
    %v311 = vld [vmem:[#allocation2 + $0x308] sm:$0xff]
    %v312 = vld [vmem:[#allocation2 + $0x310] sm:$0xff]
    %v313 = vld [vmem:[#allocation2 + $0x318] sm:$0xff]
    %v314 = vld [vmem:[#allocation2 + $0x320] sm:$0xff]
    %v315 = vld [vmem:[#allocation2 + $0x328] sm:$0xff]
    %v316 = vld [vmem:[#allocation2 + $0x330] sm:$0xff]
    %v317 = vld [vmem:[#allocation2 + $0x338] sm:$0xff]
    %v318 = vld [vmem:[#allocation2 + $0x340] sm:$0xff]
    %v319 = vld [vmem:[#allocation2 + $0x348] sm:$0xff]
    %v320 = vld [vmem:[#allocation2 + $0x350] sm:$0xff]
    %v321 = vld [vmem:[#allocation2 + $0x358] sm:$0xff]
    %v322 = vld [vmem:[#allocation2 + $0x360] sm:$0xff]
    %v323 = vld [vmem:[#allocation2 + $0x368] sm:$0xff]
    %v324 = vld [vmem:[#allocation2 + $0x370] sm:$0xff]
    %v325 = vld [vmem:[#allocation2 + $0x378] sm:$0xff]
    %v326 = vld [vmem:[#allocation2 + $0x380] sm:$0xff]
    %v327 = vld [vmem:[#allocation2 + $0x388] sm:$0xff]
    %v328 = vld [vmem:[#allocation2 + $0x390] sm:$0xff]
    %v329 = vld [vmem:[#allocation2 + $0x398] sm:$0xff]
    %v330 = vld [vmem:[#allocation2 + $0x3a0] sm:$0xff]
    %v331 = vld [vmem:[#allocation2 + $0x3a8] sm:$0xff]
    %v332 = vld [vmem:[#allocation2 + $0x3b0] sm:$0xff]
    %v333 = vld [vmem:[#allocation2 + $0x3b8] sm:$0xff]
    %v334 = vld [vmem:[#allocation2 + $0x3c0] sm:$0xff]
    %v335 = vld [vmem:[#allocation2 + $0x3c8] sm:$0xff]
    %v336 = vld [vmem:[#allocation2 + $0x3d0] sm:$0xff]
    %v337 = vld [vmem:[#allocation2 + $0x3d8] sm:$0xff]
    %v338 = vld [vmem:[#allocation2 + $0x3e0] sm:$0xff]
    %v339 = vld [vmem:[#allocation2 + $0x3e8] sm:$0xff]
    %v340 = vld [vmem:[#allocation2 + $0x3f0] sm:$0xff]
    %v341 = vld [vmem:[#allocation2 + $0x3f8] sm:$0xff]
    %v342 = vld [vmem:[#allocation4] sm:$0xff]
    %v344 = vlaneseq
    %v345 = vshrl.u32 %v344, 7
    %v346 = vsub.s32 0, %v345
    %v347 = vrot.slane %v342, %v346
    %v348 = vlaneseq
    %v349 = vshrl.u32 %v348, 7
    %v350 = vsub.s32 1, %v349
    %v351 = vrot.slane %v342, %v350
    %v352 = vlaneseq
    %v353 = vshrl.u32 %v352, 7
    %v354 = vsub.s32 2, %v353
    %v355 = vrot.slane %v342, %v354
    %v356 = vlaneseq
    %v357 = vshrl.u32 %v356, 7
    %v358 = vsub.s32 3, %v357
    %v359 = vrot.slane %v342, %v358
    %v360 = vlaneseq
    %v361 = vshrl.u32 %v360, 7
    %v362 = vsub.s32 4, %v361
    %v363 = vrot.slane %v342, %v362
    %v364 = vlaneseq
    %v365 = vshrl.u32 %v364, 7
    %v366 = vsub.s32 5, %v365
    %v367 = vrot.slane %v342, %v366
    %v368 = vlaneseq
    %v369 = vshrl.u32 %v368, 7
    %v370 = vsub.s32 6, %v369
    %v371 = vrot.slane %v342, %v370
    %v372 = vlaneseq
    %v373 = vshrl.u32 %v372, 7
    %v374 = vsub.s32 7, %v373
    %v375 = vrot.slane %v342, %v374
    %384 = vmatprep.subr.mxu0 %v215
    %385 = vmatpush1.msra.mxu0 %v214
    %386 = vmatprep.subr.mxu0 %v223
    %387 = vmatpush1.msra.mxu0 %v222
    %388 = vmatprep.subr.mxu0 %v231
    %389 = vmatpush1.msra.mxu0 %v230
    %390 = vmatprep.subr.mxu0 %v239
    %391 = vmatpush1.msra.mxu0 %v238
    %392 = vmatprep.subr.mxu0 %v247
    %393 = vmatpush1.msra.mxu0 %v246
    %394 = vmatprep.subr.mxu0 %v255
    %395 = vmatpush1.msra.mxu0 %v254
    %396 = vmatprep.subr.mxu0 %v263
    %397 = vmatpush1.msra.mxu0 %v262
    %398 = vmatprep.subr.mxu0 %v271
    %399 = vmatpush1.msra.mxu0 %v270
    %400 = vmatprep.subr.mxu0 %v279
    %401 = vmatpush1.msra.mxu0 %v278
    %402 = vmatprep.subr.mxu0 %v287
    %403 = vmatpush1.msra.mxu0 %v286
    %404 = vmatprep.subr.mxu0 %v295
    %405 = vmatpush1.msra.mxu0 %v294
    %406 = vmatprep.subr.mxu0 %v303
    %407 = vmatpush1.msra.mxu0 %v302
    %408 = vmatprep.subr.mxu0 %v311
    %409 = vmatpush1.msra.mxu0 %v310
    %410 = vmatprep.subr.mxu0 %v319
    %411 = vmatpush1.msra.mxu0 %v318
    %412 = vmatprep.subr.mxu0 %v327
    %413 = vmatpush1.msra.mxu0 %v326
    %414 = vmatprep.subr.mxu0 %v335
    %415 = vmatpush1.msra.mxu0 %v334
    %416 = vmatprep.subr.mxu0 0.0
    %417 = vmatpush1.msra.mxu0 0.0
    %418 = vmatprep.subr.mxu0 0.0
    %419 = vmatpush1.msra.mxu0 0.0
    %420 = vmatprep.subr.mxu0 0.0
    %421 = vmatpush1.msra.mxu0 0.0
    %422 = vmatprep.subr.mxu0 0.0
    %423 = vmatpush1.msra.mxu0 0.0
    %424 = vmatprep.subr.mxu0 0.0
    %425 = vmatpush1.msra.mxu0 0.0
    %426 = vmatprep.subr.mxu0 0.0
    %427 = vmatpush1.msra.mxu0 0.0
    %428 = vmatprep.subr.mxu0 0.0
    %429 = vmatpush1.msra.mxu0 0.0
    %430 = vmatprep.subr.mxu0 0.0
    %431 = vmatpush1.msra.mxu0 0.0
    %432 = vmatprep.subr.mxu0 0.0
    %433 = vmatpush1.msra.mxu0 0.0
    %434 = vmatprep.subr.mxu0 0.0
    %435 = vmatpush1.msra.mxu0 0.0
    %436 = vmatprep.subr.mxu0 0.0
    %437 = vmatpush1.msra.mxu0 0.0
    %438 = vmatprep.subr.mxu0 0.0
    %439 = vmatpush1.msra.mxu0 0.0
    %440 = vmatprep.subr.mxu0 0.0
    %441 = vmatpush1.msra.mxu0 0.0
    %442 = vmatprep.subr.mxu0 0.0
    %443 = vmatpush1.msra.mxu0 0.0
    %444 = vmatprep.subr.mxu0 0.0
    %445 = vmatpush1.msra.mxu0 0.0
    %446 = vmatprep.subr.mxu0 0.0
    %447 = vmatpush1.msra.mxu0 0.0
    %448 = vmatprep.mubr.f32.mxu0 0.0
    %449 = vmatmul.mubr.f32.gmra.mrb[0].mxu0 %v213
    %v450 = vpop.f32.mrb[0].mxu0
    %v451 = vadd.f32 %v347, %v450
    %v452 = vpop.f32.mrb[0].mxu0
    %v453 = vadd.f32 %v351, %v452
    %454 = vdwg.mxu0
    %455 = vmatprep.subr.mxu0 %v217
    %456 = vmatpush1.msra.mxu0 %v216
    %457 = vmatprep.subr.mxu0 %v225
    %458 = vmatpush1.msra.mxu0 %v224
    %459 = vmatprep.subr.mxu0 %v233
    %460 = vmatpush1.msra.mxu0 %v232
    %461 = vmatprep.subr.mxu0 %v241
    %462 = vmatpush1.msra.mxu0 %v240
    %463 = vmatprep.subr.mxu0 %v249
    %464 = vmatpush1.msra.mxu0 %v248
    %465 = vmatprep.subr.mxu0 %v257
    %466 = vmatpush1.msra.mxu0 %v256
    %467 = vmatprep.subr.mxu0 %v265
    %468 = vmatpush1.msra.mxu0 %v264
    %469 = vmatprep.subr.mxu0 %v273
    %470 = vmatpush1.msra.mxu0 %v272
    %471 = vmatprep.subr.mxu0 %v281
    %472 = vmatpush1.msra.mxu0 %v280
    %473 = vmatprep.subr.mxu0 %v289
    %474 = vmatpush1.msra.mxu0 %v288
    %475 = vmatprep.subr.mxu0 %v297
    %476 = vmatpush1.msra.mxu0 %v296
    %477 = vmatprep.subr.mxu0 %v305
    %478 = vmatpush1.msra.mxu0 %v304
    %479 = vmatprep.subr.mxu0 %v313
    %480 = vmatpush1.msra.mxu0 %v312
    %481 = vmatprep.subr.mxu0 %v321
    %482 = vmatpush1.msra.mxu0 %v320
    %483 = vmatprep.subr.mxu0 %v329
    %484 = vmatpush1.msra.mxu0 %v328
    %485 = vmatprep.subr.mxu0 %v337
    %486 = vmatpush1.msra.mxu0 %v336
    %487 = vmatprep.subr.mxu0 0.0
    %488 = vmatpush1.msra.mxu0 0.0
    %489 = vmatprep.subr.mxu0 0.0
    %490 = vmatpush1.msra.mxu0 0.0
    %491 = vmatprep.subr.mxu0 0.0
    %492 = vmatpush1.msra.mxu0 0.0
    %493 = vmatprep.subr.mxu0 0.0
    %494 = vmatpush1.msra.mxu0 0.0
    %495 = vmatprep.subr.mxu0 0.0
    %496 = vmatpush1.msra.mxu0 0.0
    %497 = vmatprep.subr.mxu0 0.0
    %498 = vmatpush1.msra.mxu0 0.0
    %499 = vmatprep.subr.mxu0 0.0
    %500 = vmatpush1.msra.mxu0 0.0
    %501 = vmatprep.subr.mxu0 0.0
    %502 = vmatpush1.msra.mxu0 0.0
    %503 = vmatprep.subr.mxu0 0.0
    %504 = vmatpush1.msra.mxu0 0.0
    %505 = vmatprep.subr.mxu0 0.0
    %506 = vmatpush1.msra.mxu0 0.0
    %507 = vmatprep.subr.mxu0 0.0
    %508 = vmatpush1.msra.mxu0 0.0
    %509 = vmatprep.subr.mxu0 0.0
    %510 = vmatpush1.msra.mxu0 0.0
    %511 = vmatprep.subr.mxu0 0.0
    %512 = vmatpush1.msra.mxu0 0.0
    %513 = vmatprep.subr.mxu0 0.0
    %514 = vmatpush1.msra.mxu0 0.0
    %515 = vmatprep.subr.mxu0 0.0
    %516 = vmatpush1.msra.mxu0 0.0
    %517 = vmatprep.subr.mxu0 0.0
    %518 = vmatpush1.msra.mxu0 0.0
    %519 = vmatprep.mubr.f32.mxu0 0.0
    %520 = vmatmul.mubr.f32.gmra.mrb[0].mxu0 %v213
    %v521 = vpop.f32.mrb[0].mxu0
    %v522 = vadd.f32 %v355, %v521
    %v523 = vpop.f32.mrb[0].mxu0
    %v524 = vadd.f32 %v359, %v523
    %525 = vdwg.mxu0
    %526 = vmatprep.subr.mxu0 %v219
    %527 = vmatpush1.msra.mxu0 %v218
    %528 = vmatprep.subr.mxu0 %v227
    %529 = vmatpush1.msra.mxu0 %v226
    %530 = vmatprep.subr.mxu0 %v235
    %531 = vmatpush1.msra.mxu0 %v234
    %532 = vmatprep.subr.mxu0 %v243
    %533 = vmatpush1.msra.mxu0 %v242
    %534 = vmatprep.subr.mxu0 %v251
    %535 = vmatpush1.msra.mxu0 %v250
    %536 = vmatprep.subr.mxu0 %v259
    %537 = vmatpush1.msra.mxu0 %v258
    %538 = vmatprep.subr.mxu0 %v267
    %539 = vmatpush1.msra.mxu0 %v266
    %540 = vmatprep.subr.mxu0 %v275
    %541 = vmatpush1.msra.mxu0 %v274
    %542 = vmatprep.subr.mxu0 %v283
    %543 = vmatpush1.msra.mxu0 %v282
    %544 = vmatprep.subr.mxu0 %v291
    %545 = vmatpush1.msra.mxu0 %v290
    %546 = vmatprep.subr.mxu0 %v299
    %547 = vmatpush1.msra.mxu0 %v298
    %548 = vmatprep.subr.mxu0 %v307
    %549 = vmatpush1.msra.mxu0 %v306
    %550 = vmatprep.subr.mxu0 %v315
    %551 = vmatpush1.msra.mxu0 %v314
    %552 = vmatprep.subr.mxu0 %v323
    %553 = vmatpush1.msra.mxu0 %v322
    %554 = vmatprep.subr.mxu0 %v331
    %555 = vmatpush1.msra.mxu0 %v330
    %556 = vmatprep.subr.mxu0 %v339
    %557 = vmatpush1.msra.mxu0 %v338
    %558 = vmatprep.subr.mxu0 0.0
    %559 = vmatpush1.msra.mxu0 0.0
    %560 = vmatprep.subr.mxu0 0.0
    %561 = vmatpush1.msra.mxu0 0.0
    %562 = vmatprep.subr.mxu0 0.0
    %563 = vmatpush1.msra.mxu0 0.0
    %564 = vmatprep.subr.mxu0 0.0
    %565 = vmatpush1.msra.mxu0 0.0
    %566 = vmatprep.subr.mxu0 0.0
    %567 = vmatpush1.msra.mxu0 0.0
    %568 = vmatprep.subr.mxu0 0.0
    %569 = vmatpush1.msra.mxu0 0.0
    %570 = vmatprep.subr.mxu0 0.0
    %571 = vmatpush1.msra.mxu0 0.0
    %572 = vmatprep.subr.mxu0 0.0
    %573 = vmatpush1.msra.mxu0 0.0
    %574 = vmatprep.subr.mxu0 0.0
    %575 = vmatpush1.msra.mxu0 0.0
    %576 = vmatprep.subr.mxu0 0.0
    %577 = vmatpush1.msra.mxu0 0.0
    %578 = vmatprep.subr.mxu0 0.0
    %579 = vmatpush1.msra.mxu0 0.0
    %580 = vmatprep.subr.mxu0 0.0
    %581 = vmatpush1.msra.mxu0 0.0
    %582 = vmatprep.subr.mxu0 0.0
    %583 = vmatpush1.msra.mxu0 0.0
    %584 = vmatprep.subr.mxu0 0.0
    %585 = vmatpush1.msra.mxu0 0.0
    %586 = vmatprep.subr.mxu0 0.0
    %587 = vmatpush1.msra.mxu0 0.0
    %588 = vmatprep.subr.mxu0 0.0
    %589 = vmatpush1.msra.mxu0 0.0
    %590 = vmatprep.mubr.f32.mxu0 0.0
    %591 = vmatmul.mubr.f32.gmra.mrb[0].mxu0 %v213
    %v592 = vpop.f32.mrb[0].mxu0
    %v593 = vadd.f32 %v363, %v592
    %v594 = vpop.f32.mrb[0].mxu0
    %v595 = vadd.f32 %v367, %v594
    %596 = vdwg.mxu0
    %597 = vmatprep.subr.mxu0 %v221
    %598 = vmatpush1.msra.mxu0 %v220
    %599 = vmatprep.subr.mxu0 %v229
    %600 = vmatpush1.msra.mxu0 %v228
    %601 = vmatprep.subr.mxu0 %v237
    %602 = vmatpush1.msra.mxu0 %v236
    %603 = vmatprep.subr.mxu0 %v245
    %604 = vmatpush1.msra.mxu0 %v244
    %605 = vmatprep.subr.mxu0 %v253
    %606 = vmatpush1.msra.mxu0 %v252
    %607 = vmatprep.subr.mxu0 %v261
    %608 = vmatpush1.msra.mxu0 %v260
    %609 = vmatprep.subr.mxu0 %v269
    %610 = vmatpush1.msra.mxu0 %v268
    %611 = vmatprep.subr.mxu0 %v277
    %612 = vmatpush1.msra.mxu0 %v276
    %613 = vmatprep.subr.mxu0 %v285
    %614 = vmatpush1.msra.mxu0 %v284
    %615 = vmatprep.subr.mxu0 %v293
    %616 = vmatpush1.msra.mxu0 %v292
    %617 = vmatprep.subr.mxu0 %v301
    %618 = vmatpush1.msra.mxu0 %v300
    %619 = vmatprep.subr.mxu0 %v309
    %620 = vmatpush1.msra.mxu0 %v308
    %621 = vmatprep.subr.mxu0 %v317
    %622 = vmatpush1.msra.mxu0 %v316
    %623 = vmatprep.subr.mxu0 %v325
    %624 = vmatpush1.msra.mxu0 %v324
    %625 = vmatprep.subr.mxu0 %v333
    %626 = vmatpush1.msra.mxu0 %v332
    %627 = vmatprep.subr.mxu0 %v341
    %628 = vmatpush1.msra.mxu0 %v340
    %629 = vmatprep.subr.mxu0 0.0
    %630 = vmatpush1.msra.mxu0 0.0
    %631 = vmatprep.subr.mxu0 0.0
    %632 = vmatpush1.msra.mxu0 0.0
    %633 = vmatprep.subr.mxu0 0.0
    %634 = vmatpush1.msra.mxu0 0.0
    %635 = vmatprep.subr.mxu0 0.0
    %636 = vmatpush1.msra.mxu0 0.0
    %637 = vmatprep.subr.mxu0 0.0
    %638 = vmatpush1.msra.mxu0 0.0
    %639 = vmatprep.subr.mxu0 0.0
    %640 = vmatpush1.msra.mxu0 0.0
    %641 = vmatprep.subr.mxu0 0.0
    %642 = vmatpush1.msra.mxu0 0.0
    %643 = vmatprep.subr.mxu0 0.0
    %644 = vmatpush1.msra.mxu0 0.0
    %645 = vmatprep.subr.mxu0 0.0
    %646 = vmatpush1.msra.mxu0 0.0
    %647 = vmatprep.subr.mxu0 0.0
    %648 = vmatpush1.msra.mxu0 0.0
    %649 = vmatprep.subr.mxu0 0.0
    %650 = vmatpush1.msra.mxu0 0.0
    %651 = vmatprep.subr.mxu0 0.0
    %652 = vmatpush1.msra.mxu0 0.0
    %653 = vmatprep.subr.mxu0 0.0
    %654 = vmatpush1.msra.mxu0 0.0
    %655 = vmatprep.subr.mxu0 0.0
    %656 = vmatpush1.msra.mxu0 0.0
    %657 = vmatprep.subr.mxu0 0.0
    %658 = vmatpush1.msra.mxu0 0.0
    %659 = vmatprep.subr.mxu0 0.0
    %660 = vmatpush1.msra.mxu0 0.0
    %661 = vmatprep.mubr.f32.mxu0 0.0
    %662 = vmatmul.mubr.f32.gmra.mrb[0].mxu0 %v213
    %v663 = vpop.f32.mrb[0].mxu0
    %v664 = vadd.f32 %v371, %v663
    %v665 = vpop.f32.mrb[0].mxu0
    %v666 = vadd.f32 %v375, %v665
    %667 = vdwg.mxu0
    %v668 = vld [vmem:[#allocation6] sm:$0xff]
    %v669 = vld [vmem:[#allocation6 + $0x8] sm:$0xff]
    %v670 = vld [vmem:[#allocation6 + $0x10] sm:$0xff]
    %v671 = vld [vmem:[#allocation6 + $0x18] sm:$0xff]
    %v672 = vld [vmem:[#allocation6 + $0x20] sm:$0xff]
    %v673 = vld [vmem:[#allocation6 + $0x28] sm:$0xff]
    %v674 = vld [vmem:[#allocation6 + $0x30] sm:$0xff]
    %v675 = vld [vmem:[#allocation6 + $0x38] sm:$0xff]
    %v676 = vld [vmem:[#allocation6 + $0x40] sm:$0xff]
    %v677 = vld [vmem:[#allocation6 + $0x48] sm:$0xff]
    %v678 = vld [vmem:[#allocation6 + $0x50] sm:$0xff]
    %v679 = vld [vmem:[#allocation6 + $0x58] sm:$0xff]
    %v680 = vld [vmem:[#allocation6 + $0x60] sm:$0xff]
    %v681 = vld [vmem:[#allocation6 + $0x68] sm:$0xff]
    %v682 = vld [vmem:[#allocation6 + $0x70] sm:$0xff]
    %v683 = vld [vmem:[#allocation6 + $0x78] sm:$0xff]
    %v684 = vld [vmem:[#allocation6 + $0x80] sm:$0xff]
    %v685 = vld [vmem:[#allocation6 + $0x88] sm:$0xff]
    %v686 = vld [vmem:[#allocation6 + $0x90] sm:$0xff]
    %v687 = vld [vmem:[#allocation6 + $0x98] sm:$0xff]
    %v688 = vld [vmem:[#allocation6 + $0xa0] sm:$0xff]
    %v689 = vld [vmem:[#allocation6 + $0xa8] sm:$0xff]
    %v690 = vld [vmem:[#allocation6 + $0xb0] sm:$0xff]
    %v691 = vld [vmem:[#allocation6 + $0xb8] sm:$0xff]
    %v692 = vld [vmem:[#allocation6 + $0xc0] sm:$0xff]
    %v693 = vld [vmem:[#allocation6 + $0xc8] sm:$0xff]
    %v694 = vld [vmem:[#allocation6 + $0xd0] sm:$0xff]
    %v695 = vld [vmem:[#allocation6 + $0xd8] sm:$0xff]
    %v696 = vld [vmem:[#allocation6 + $0xe0] sm:$0xff]
    %v697 = vld [vmem:[#allocation6 + $0xe8] sm:$0xff]
    %v698 = vld [vmem:[#allocation6 + $0xf0] sm:$0xff]
    %v699 = vld [vmem:[#allocation6 + $0xf8] sm:$0xff]
    %v700 = vld [vmem:[#allocation6 + $0x100] sm:$0xff]
    %v701 = vld [vmem:[#allocation6 + $0x108] sm:$0xff]
    %v702 = vld [vmem:[#allocation6 + $0x110] sm:$0xff]
    %v703 = vld [vmem:[#allocation6 + $0x118] sm:$0xff]
    %v704 = vld [vmem:[#allocation6 + $0x120] sm:$0xff]
    %v705 = vld [vmem:[#allocation6 + $0x128] sm:$0xff]
    %v706 = vld [vmem:[#allocation6 + $0x130] sm:$0xff]
    %v707 = vld [vmem:[#allocation6 + $0x138] sm:$0xff]
    %v708 = vld [vmem:[#allocation6 + $0x140] sm:$0xff]
    %v709 = vld [vmem:[#allocation6 + $0x148] sm:$0xff]
    %v710 = vld [vmem:[#allocation6 + $0x150] sm:$0xff]
    %v711 = vld [vmem:[#allocation6 + $0x158] sm:$0xff]
    %v712 = vld [vmem:[#allocation6 + $0x160] sm:$0xff]
    %v713 = vld [vmem:[#allocation6 + $0x168] sm:$0xff]
    %v714 = vld [vmem:[#allocation6 + $0x170] sm:$0xff]
    %v715 = vld [vmem:[#allocation6 + $0x178] sm:$0xff]
    %v716 = vld [vmem:[#allocation6 + $0x180] sm:$0xff]
    %v717 = vld [vmem:[#allocation6 + $0x188] sm:$0xff]
    %v718 = vld [vmem:[#allocation6 + $0x190] sm:$0xff]
    %v719 = vld [vmem:[#allocation6 + $0x198] sm:$0xff]
    %v720 = vld [vmem:[#allocation6 + $0x1a0] sm:$0xff]
    %v721 = vld [vmem:[#allocation6 + $0x1a8] sm:$0xff]
    %v722 = vld [vmem:[#allocation6 + $0x1b0] sm:$0xff]
    %v723 = vld [vmem:[#allocation6 + $0x1b8] sm:$0xff]
    %v724 = vld [vmem:[#allocation6 + $0x1c0] sm:$0xff]
    %v725 = vld [vmem:[#allocation6 + $0x1c8] sm:$0xff]
    %v726 = vld [vmem:[#allocation6 + $0x1d0] sm:$0xff]
    %v727 = vld [vmem:[#allocation6 + $0x1d8] sm:$0xff]
    %v728 = vld [vmem:[#allocation6 + $0x1e0] sm:$0xff]
    %v729 = vld [vmem:[#allocation6 + $0x1e8] sm:$0xff]
    %v730 = vld [vmem:[#allocation6 + $0x1f0] sm:$0xff]
    %v731 = vld [vmem:[#allocation6 + $0x1f8] sm:$0xff]
    %v732 = vld [vmem:[#allocation6 + $0x200] sm:$0xff]
    %v733 = vld [vmem:[#allocation6 + $0x208] sm:$0xff]
    %v734 = vld [vmem:[#allocation6 + $0x210] sm:$0xff]
    %v735 = vld [vmem:[#allocation6 + $0x218] sm:$0xff]
    %v736 = vld [vmem:[#allocation6 + $0x220] sm:$0xff]
    %v737 = vld [vmem:[#allocation6 + $0x228] sm:$0xff]
    %v738 = vld [vmem:[#allocation6 + $0x230] sm:$0xff]
    %v739 = vld [vmem:[#allocation6 + $0x238] sm:$0xff]
    %v740 = vld [vmem:[#allocation6 + $0x240] sm:$0xff]
    %v741 = vld [vmem:[#allocation6 + $0x248] sm:$0xff]
    %v742 = vld [vmem:[#allocation6 + $0x250] sm:$0xff]
    %v743 = vld [vmem:[#allocation6 + $0x258] sm:$0xff]
    %v744 = vld [vmem:[#allocation6 + $0x260] sm:$0xff]
    %v745 = vld [vmem:[#allocation6 + $0x268] sm:$0xff]
    %v746 = vld [vmem:[#allocation6 + $0x270] sm:$0xff]
    %v747 = vld [vmem:[#allocation6 + $0x278] sm:$0xff]
    %v748 = vld [vmem:[#allocation6 + $0x280] sm:$0xff]
    %v749 = vld [vmem:[#allocation6 + $0x288] sm:$0xff]
    %v750 = vld [vmem:[#allocation6 + $0x290] sm:$0xff]
    %v751 = vld [vmem:[#allocation6 + $0x298] sm:$0xff]
    %v752 = vld [vmem:[#allocation6 + $0x2a0] sm:$0xff]
    %v753 = vld [vmem:[#allocation6 + $0x2a8] sm:$0xff]
    %v754 = vld [vmem:[#allocation6 + $0x2b0] sm:$0xff]
    %v755 = vld [vmem:[#allocation6 + $0x2b8] sm:$0xff]
    %v756 = vld [vmem:[#allocation6 + $0x2c0] sm:$0xff]
    %v757 = vld [vmem:[#allocation6 + $0x2c8] sm:$0xff]
    %v758 = vld [vmem:[#allocation6 + $0x2d0] sm:$0xff]
    %v759 = vld [vmem:[#allocation6 + $0x2d8] sm:$0xff]
    %v760 = vld [vmem:[#allocation6 + $0x2e0] sm:$0xff]
    %v761 = vld [vmem:[#allocation6 + $0x2e8] sm:$0xff]
    %v762 = vld [vmem:[#allocation6 + $0x2f0] sm:$0xff]
    %v763 = vld [vmem:[#allocation6 + $0x2f8] sm:$0xff]
    %v764 = vld [vmem:[#allocation6 + $0x300] sm:$0xff]
    %v765 = vld [vmem:[#allocation6 + $0x308] sm:$0xff]
    %v766 = vld [vmem:[#allocation6 + $0x310] sm:$0xff]
    %v767 = vld [vmem:[#allocation6 + $0x318] sm:$0xff]
    %v768 = vld [vmem:[#allocation6 + $0x320] sm:$0xff]
    %v769 = vld [vmem:[#allocation6 + $0x328] sm:$0xff]
    %v770 = vld [vmem:[#allocation6 + $0x330] sm:$0xff]
    %v771 = vld [vmem:[#allocation6 + $0x338] sm:$0xff]
    %v772 = vld [vmem:[#allocation6 + $0x340] sm:$0xff]
    %v773 = vld [vmem:[#allocation6 + $0x348] sm:$0xff]
    %v774 = vld [vmem:[#allocation6 + $0x350] sm:$0xff]
    %v775 = vld [vmem:[#allocation6 + $0x358] sm:$0xff]
    %v776 = vld [vmem:[#allocation6 + $0x360] sm:$0xff]
    %v777 = vld [vmem:[#allocation6 + $0x368] sm:$0xff]
    %v778 = vld [vmem:[#allocation6 + $0x370] sm:$0xff]
    %v779 = vld [vmem:[#allocation6 + $0x378] sm:$0xff]
    %v780 = vld [vmem:[#allocation6 + $0x380] sm:$0xff]
    %v781 = vld [vmem:[#allocation6 + $0x388] sm:$0xff]
    %v782 = vld [vmem:[#allocation6 + $0x390] sm:$0xff]
    %v783 = vld [vmem:[#allocation6 + $0x398] sm:$0xff]
    %v784 = vld [vmem:[#allocation6 + $0x3a0] sm:$0xff]
    %v785 = vld [vmem:[#allocation6 + $0x3a8] sm:$0xff]
    %v786 = vld [vmem:[#allocation6 + $0x3b0] sm:$0xff]
    %v787 = vld [vmem:[#allocation6 + $0x3b8] sm:$0xff]
    %v788 = vld [vmem:[#allocation6 + $0x3c0] sm:$0xff]
    %v789 = vld [vmem:[#allocation6 + $0x3c8] sm:$0xff]
    %v790 = vld [vmem:[#allocation6 + $0x3d0] sm:$0xff]
    %v791 = vld [vmem:[#allocation6 + $0x3d8] sm:$0xff]
    %v792 = vld [vmem:[#allocation6 + $0x3e0] sm:$0xff]
    %v793 = vld [vmem:[#allocation6 + $0x3e8] sm:$0xff]
    %v794 = vld [vmem:[#allocation6 + $0x3f0] sm:$0xff]
    %v795 = vld [vmem:[#allocation6 + $0x3f8] sm:$0xff]
    %v796 = vld [vmem:[#allocation6 + $0x400] sm:$0xff]
    %v797 = vld [vmem:[#allocation6 + $0x408] sm:$0xff]
    %v798 = vld [vmem:[#allocation6 + $0x410] sm:$0xff]
    %v799 = vld [vmem:[#allocation6 + $0x418] sm:$0xff]
    %v800 = vld [vmem:[#allocation6 + $0x420] sm:$0xff]
    %v801 = vld [vmem:[#allocation6 + $0x428] sm:$0xff]
    %v802 = vld [vmem:[#allocation6 + $0x430] sm:$0xff]
    %v803 = vld [vmem:[#allocation6 + $0x438] sm:$0xff]
    %v804 = vld [vmem:[#allocation6 + $0x440] sm:$0xff]
    %v805 = vld [vmem:[#allocation6 + $0x448] sm:$0xff]
    %v806 = vld [vmem:[#allocation6 + $0x450] sm:$0xff]
    %v807 = vld [vmem:[#allocation6 + $0x458] sm:$0xff]
    %v808 = vld [vmem:[#allocation6 + $0x460] sm:$0xff]
    %v809 = vld [vmem:[#allocation6 + $0x468] sm:$0xff]
    %v810 = vld [vmem:[#allocation6 + $0x470] sm:$0xff]
    %v811 = vld [vmem:[#allocation6 + $0x478] sm:$0xff]
    %v812 = vld [vmem:[#allocation6 + $0x480] sm:$0xff]
    %v813 = vld [vmem:[#allocation6 + $0x488] sm:$0xff]
    %v814 = vld [vmem:[#allocation6 + $0x490] sm:$0xff]
    %v815 = vld [vmem:[#allocation6 + $0x498] sm:$0xff]
    %v816 = vld [vmem:[#allocation6 + $0x4a0] sm:$0xff]
    %v817 = vld [vmem:[#allocation6 + $0x4a8] sm:$0xff]
    %v818 = vld [vmem:[#allocation6 + $0x4b0] sm:$0xff]
    %v819 = vld [vmem:[#allocation6 + $0x4b8] sm:$0xff]
    %v820 = vld [vmem:[#allocation6 + $0x4c0] sm:$0xff]
    %v821 = vld [vmem:[#allocation6 + $0x4c8] sm:$0xff]
    %v822 = vld [vmem:[#allocation6 + $0x4d0] sm:$0xff]
    %v823 = vld [vmem:[#allocation6 + $0x4d8] sm:$0xff]
    %v824 = vld [vmem:[#allocation6 + $0x4e0] sm:$0xff]
    %v825 = vld [vmem:[#allocation6 + $0x4e8] sm:$0xff]
    %v826 = vld [vmem:[#allocation6 + $0x4f0] sm:$0xff]
    %v827 = vld [vmem:[#allocation6 + $0x4f8] sm:$0xff]
    %v828 = vld [vmem:[#allocation6 + $0x500] sm:$0xff]
    %v829 = vld [vmem:[#allocation6 + $0x508] sm:$0xff]
    %v830 = vld [vmem:[#allocation6 + $0x510] sm:$0xff]
    %v831 = vld [vmem:[#allocation6 + $0x518] sm:$0xff]
    %v832 = vld [vmem:[#allocation6 + $0x520] sm:$0xff]
    %v833 = vld [vmem:[#allocation6 + $0x528] sm:$0xff]
    %v834 = vld [vmem:[#allocation6 + $0x530] sm:$0xff]
    %v835 = vld [vmem:[#allocation6 + $0x538] sm:$0xff]
    %v836 = vld [vmem:[#allocation6 + $0x540] sm:$0xff]
    %v837 = vld [vmem:[#allocation6 + $0x548] sm:$0xff]
    %v838 = vld [vmem:[#allocation6 + $0x550] sm:$0xff]
    %v839 = vld [vmem:[#allocation6 + $0x558] sm:$0xff]
    %v840 = vld [vmem:[#allocation6 + $0x560] sm:$0xff]
    %v841 = vld [vmem:[#allocation6 + $0x568] sm:$0xff]
    %v842 = vld [vmem:[#allocation6 + $0x570] sm:$0xff]
    %v843 = vld [vmem:[#allocation6 + $0x578] sm:$0xff]
    %v844 = vld [vmem:[#allocation6 + $0x580] sm:$0xff]
    %v845 = vld [vmem:[#allocation6 + $0x588] sm:$0xff]
    %v846 = vld [vmem:[#allocation6 + $0x590] sm:$0xff]
    %v847 = vld [vmem:[#allocation6 + $0x598] sm:$0xff]
    %v848 = vld [vmem:[#allocation6 + $0x5a0] sm:$0xff]
    %v849 = vld [vmem:[#allocation6 + $0x5a8] sm:$0xff]
    %v850 = vld [vmem:[#allocation6 + $0x5b0] sm:$0xff]
    %v851 = vld [vmem:[#allocation6 + $0x5b8] sm:$0xff]
    %v852 = vld [vmem:[#allocation6 + $0x5c0] sm:$0xff]
    %v853 = vld [vmem:[#allocation6 + $0x5c8] sm:$0xff]
    %v854 = vld [vmem:[#allocation6 + $0x5d0] sm:$0xff]
    %v855 = vld [vmem:[#allocation6 + $0x5d8] sm:$0xff]
    %v856 = vld [vmem:[#allocation6 + $0x5e0] sm:$0xff]
    %v857 = vld [vmem:[#allocation6 + $0x5e8] sm:$0xff]
    %v858 = vld [vmem:[#allocation6 + $0x5f0] sm:$0xff]
    %v859 = vld [vmem:[#allocation6 + $0x5f8] sm:$0xff]
    %v860 = vld [vmem:[#allocation6 + $0x600] sm:$0xff]
    %v861 = vld [vmem:[#allocation6 + $0x608] sm:$0xff]
    %v862 = vld [vmem:[#allocation6 + $0x610] sm:$0xff]
    %v863 = vld [vmem:[#allocation6 + $0x618] sm:$0xff]
    %v864 = vld [vmem:[#allocation6 + $0x620] sm:$0xff]
    %v865 = vld [vmem:[#allocation6 + $0x628] sm:$0xff]
    %v866 = vld [vmem:[#allocation6 + $0x630] sm:$0xff]
    %v867 = vld [vmem:[#allocation6 + $0x638] sm:$0xff]
    %v868 = vld [vmem:[#allocation6 + $0x640] sm:$0xff]
    %v869 = vld [vmem:[#allocation6 + $0x648] sm:$0xff]
    %v870 = vld [vmem:[#allocation6 + $0x650] sm:$0xff]
    %v871 = vld [vmem:[#allocation6 + $0x658] sm:$0xff]
    %v872 = vld [vmem:[#allocation6 + $0x660] sm:$0xff]
    %v873 = vld [vmem:[#allocation6 + $0x668] sm:$0xff]
    %v874 = vld [vmem:[#allocation6 + $0x670] sm:$0xff]
    %v875 = vld [vmem:[#allocation6 + $0x678] sm:$0xff]
    %v876 = vld [vmem:[#allocation6 + $0x680] sm:$0xff]
    %v877 = vld [vmem:[#allocation6 + $0x688] sm:$0xff]
    %v878 = vld [vmem:[#allocation6 + $0x690] sm:$0xff]
    %v879 = vld [vmem:[#allocation6 + $0x698] sm:$0xff]
    %v880 = vld [vmem:[#allocation6 + $0x6a0] sm:$0xff]
    %v881 = vld [vmem:[#allocation6 + $0x6a8] sm:$0xff]
    %v882 = vld [vmem:[#allocation6 + $0x6b0] sm:$0xff]
    %v883 = vld [vmem:[#allocation6 + $0x6b8] sm:$0xff]
    %v884 = vld [vmem:[#allocation6 + $0x6c0] sm:$0xff]
    %v885 = vld [vmem:[#allocation6 + $0x6c8] sm:$0xff]
    %v886 = vld [vmem:[#allocation6 + $0x6d0] sm:$0xff]
    %v887 = vld [vmem:[#allocation6 + $0x6d8] sm:$0xff]
    %v888 = vld [vmem:[#allocation6 + $0x6e0] sm:$0xff]
    %v889 = vld [vmem:[#allocation6 + $0x6e8] sm:$0xff]
    %v890 = vld [vmem:[#allocation6 + $0x6f0] sm:$0xff]
    %v891 = vld [vmem:[#allocation6 + $0x6f8] sm:$0xff]
    %v892 = vld [vmem:[#allocation6 + $0x700] sm:$0xff]
    %v893 = vld [vmem:[#allocation6 + $0x708] sm:$0xff]
    %v894 = vld [vmem:[#allocation6 + $0x710] sm:$0xff]
    %v895 = vld [vmem:[#allocation6 + $0x718] sm:$0xff]
    %v896 = vld [vmem:[#allocation6 + $0x720] sm:$0xff]
    %v897 = vld [vmem:[#allocation6 + $0x728] sm:$0xff]
    %v898 = vld [vmem:[#allocation6 + $0x730] sm:$0xff]
    %v899 = vld [vmem:[#allocation6 + $0x738] sm:$0xff]
    %v900 = vld [vmem:[#allocation6 + $0x740] sm:$0xff]
    %v901 = vld [vmem:[#allocation6 + $0x748] sm:$0xff]
    %v902 = vld [vmem:[#allocation6 + $0x750] sm:$0xff]
    %v903 = vld [vmem:[#allocation6 + $0x758] sm:$0xff]
    %v904 = vld [vmem:[#allocation6 + $0x760] sm:$0xff]
    %v905 = vld [vmem:[#allocation6 + $0x768] sm:$0xff]
    %v906 = vld [vmem:[#allocation6 + $0x770] sm:$0xff]
    %v907 = vld [vmem:[#allocation6 + $0x778] sm:$0xff]
    %v908 = vld [vmem:[#allocation6 + $0x780] sm:$0xff]
    %v909 = vld [vmem:[#allocation6 + $0x788] sm:$0xff]
    %v910 = vld [vmem:[#allocation6 + $0x790] sm:$0xff]
    %v911 = vld [vmem:[#allocation6 + $0x798] sm:$0xff]
    %v912 = vld [vmem:[#allocation6 + $0x7a0] sm:$0xff]
    %v913 = vld [vmem:[#allocation6 + $0x7a8] sm:$0xff]
    %v914 = vld [vmem:[#allocation6 + $0x7b0] sm:$0xff]
    %v915 = vld [vmem:[#allocation6 + $0x7b8] sm:$0xff]
    %v916 = vld [vmem:[#allocation6 + $0x7c0] sm:$0xff]
    %v917 = vld [vmem:[#allocation6 + $0x7c8] sm:$0xff]
    %v918 = vld [vmem:[#allocation6 + $0x7d0] sm:$0xff]
    %v919 = vld [vmem:[#allocation6 + $0x7d8] sm:$0xff]
    %v920 = vld [vmem:[#allocation6 + $0x7e0] sm:$0xff]
    %v921 = vld [vmem:[#allocation6 + $0x7e8] sm:$0xff]
    %v922 = vld [vmem:[#allocation6 + $0x7f0] sm:$0xff]
    %v923 = vld [vmem:[#allocation6 + $0x7f8] sm:$0xff]
    %v924 = vld [vmem:[#allocation6 + $0x800] sm:$0xff]
    %v925 = vld [vmem:[#allocation6 + $0x808] sm:$0xff]
    %v926 = vld [vmem:[#allocation6 + $0x810] sm:$0xff]
    %v927 = vld [vmem:[#allocation6 + $0x818] sm:$0xff]
    %v928 = vld [vmem:[#allocation6 + $0x820] sm:$0xff]
    %v929 = vld [vmem:[#allocation6 + $0x828] sm:$0xff]
    %v930 = vld [vmem:[#allocation6 + $0x830] sm:$0xff]
    %v931 = vld [vmem:[#allocation6 + $0x838] sm:$0xff]
    %v932 = vld [vmem:[#allocation6 + $0x840] sm:$0xff]
    %v933 = vld [vmem:[#allocation6 + $0x848] sm:$0xff]
    %v934 = vld [vmem:[#allocation6 + $0x850] sm:$0xff]
    %v935 = vld [vmem:[#allocation6 + $0x858] sm:$0xff]
    %v936 = vld [vmem:[#allocation6 + $0x860] sm:$0xff]
    %v937 = vld [vmem:[#allocation6 + $0x868] sm:$0xff]
    %v938 = vld [vmem:[#allocation6 + $0x870] sm:$0xff]
    %v939 = vld [vmem:[#allocation6 + $0x878] sm:$0xff]
    %v940 = vld [vmem:[#allocation6 + $0x880] sm:$0xff]
    %v941 = vld [vmem:[#allocation6 + $0x888] sm:$0xff]
    %v942 = vld [vmem:[#allocation6 + $0x890] sm:$0xff]
    %v943 = vld [vmem:[#allocation6 + $0x898] sm:$0xff]
    %v944 = vld [vmem:[#allocation6 + $0x8a0] sm:$0xff]
    %v945 = vld [vmem:[#allocation6 + $0x8a8] sm:$0xff]
    %v946 = vld [vmem:[#allocation6 + $0x8b0] sm:$0xff]
    %v947 = vld [vmem:[#allocation6 + $0x8b8] sm:$0xff]
    %v948 = vld [vmem:[#allocation6 + $0x8c0] sm:$0xff]
    %v949 = vld [vmem:[#allocation6 + $0x8c8] sm:$0xff]
    %v950 = vld [vmem:[#allocation6 + $0x8d0] sm:$0xff]
    %v951 = vld [vmem:[#allocation6 + $0x8d8] sm:$0xff]
    %v952 = vld [vmem:[#allocation6 + $0x8e0] sm:$0xff]
    %v953 = vld [vmem:[#allocation6 + $0x8e8] sm:$0xff]
    %v954 = vld [vmem:[#allocation6 + $0x8f0] sm:$0xff]
    %v955 = vld [vmem:[#allocation6 + $0x8f8] sm:$0xff]
    %v956 = vld [vmem:[#allocation6 + $0x900] sm:$0xff]
    %v957 = vld [vmem:[#allocation6 + $0x908] sm:$0xff]
    %v958 = vld [vmem:[#allocation6 + $0x910] sm:$0xff]
    %v959 = vld [vmem:[#allocation6 + $0x918] sm:$0xff]
    %v960 = vld [vmem:[#allocation6 + $0x920] sm:$0xff]
    %v961 = vld [vmem:[#allocation6 + $0x928] sm:$0xff]
    %v962 = vld [vmem:[#allocation6 + $0x930] sm:$0xff]
    %v963 = vld [vmem:[#allocation6 + $0x938] sm:$0xff]
    %v964 = vld [vmem:[#allocation6 + $0x940] sm:$0xff]
    %v965 = vld [vmem:[#allocation6 + $0x948] sm:$0xff]
    %v966 = vld [vmem:[#allocation6 + $0x950] sm:$0xff]
    %v967 = vld [vmem:[#allocation6 + $0x958] sm:$0xff]
    %v968 = vld [vmem:[#allocation6 + $0x960] sm:$0xff]
    %v969 = vld [vmem:[#allocation6 + $0x968] sm:$0xff]
    %v970 = vld [vmem:[#allocation6 + $0x970] sm:$0xff]
    %v971 = vld [vmem:[#allocation6 + $0x978] sm:$0xff]
    %v972 = vld [vmem:[#allocation6 + $0x980] sm:$0xff]
    %v973 = vld [vmem:[#allocation6 + $0x988] sm:$0xff]
    %v974 = vld [vmem:[#allocation6 + $0x990] sm:$0xff]
    %v975 = vld [vmem:[#allocation6 + $0x998] sm:$0xff]
    %v976 = vld [vmem:[#allocation6 + $0x9a0] sm:$0xff]
    %v977 = vld [vmem:[#allocation6 + $0x9a8] sm:$0xff]
    %v978 = vld [vmem:[#allocation6 + $0x9b0] sm:$0xff]
    %v979 = vld [vmem:[#allocation6 + $0x9b8] sm:$0xff]
    %v980 = vld [vmem:[#allocation6 + $0x9c0] sm:$0xff]
    %v981 = vld [vmem:[#allocation6 + $0x9c8] sm:$0xff]
    %v982 = vld [vmem:[#allocation6 + $0x9d0] sm:$0xff]
    %v983 = vld [vmem:[#allocation6 + $0x9d8] sm:$0xff]
    %v984 = vld [vmem:[#allocation6 + $0x9e0] sm:$0xff]
    %v985 = vld [vmem:[#allocation6 + $0x9e8] sm:$0xff]
    %v986 = vld [vmem:[#allocation6 + $0x9f0] sm:$0xff]
    %v987 = vld [vmem:[#allocation6 + $0x9f8] sm:$0xff]
    %v988 = vld [vmem:[#allocation6 + $0xa00] sm:$0xff]
    %v989 = vld [vmem:[#allocation6 + $0xa08] sm:$0xff]
    %v990 = vld [vmem:[#allocation6 + $0xa10] sm:$0xff]
    %v991 = vld [vmem:[#allocation6 + $0xa18] sm:$0xff]
    %v992 = vld [vmem:[#allocation6 + $0xa20] sm:$0xff]
    %v993 = vld [vmem:[#allocation6 + $0xa28] sm:$0xff]
    %v994 = vld [vmem:[#allocation6 + $0xa30] sm:$0xff]
    %v995 = vld [vmem:[#allocation6 + $0xa38] sm:$0xff]
    %v996 = vld [vmem:[#allocation6 + $0xa40] sm:$0xff]
    %v997 = vld [vmem:[#allocation6 + $0xa48] sm:$0xff]
    %v998 = vld [vmem:[#allocation6 + $0xa50] sm:$0xff]
    %v999 = vld [vmem:[#allocation6 + $0xa58] sm:$0xff]
    %v1000 = vld [vmem:[#allocation6 + $0xa60] sm:$0xff]
    %v1001 = vld [vmem:[#allocation6 + $0xa68] sm:$0xff]
    %v1002 = vld [vmem:[#allocation6 + $0xa70] sm:$0xff]
    %v1003 = vld [vmem:[#allocation6 + $0xa78] sm:$0xff]
    %v1004 = vld [vmem:[#allocation6 + $0xa80] sm:$0xff]
    %v1005 = vld [vmem:[#allocation6 + $0xa88] sm:$0xff]
    %v1006 = vld [vmem:[#allocation6 + $0xa90] sm:$0xff]
    %v1007 = vld [vmem:[#allocation6 + $0xa98] sm:$0xff]
    %v1008 = vld [vmem:[#allocation6 + $0xaa0] sm:$0xff]
    %v1009 = vld [vmem:[#allocation6 + $0xaa8] sm:$0xff]
    %v1010 = vld [vmem:[#allocation6 + $0xab0] sm:$0xff]
    %v1011 = vld [vmem:[#allocation6 + $0xab8] sm:$0xff]
    %v1012 = vld [vmem:[#allocation6 + $0xac0] sm:$0xff]
    %v1013 = vld [vmem:[#allocation6 + $0xac8] sm:$0xff]
    %v1014 = vld [vmem:[#allocation6 + $0xad0] sm:$0xff]
    %v1015 = vld [vmem:[#allocation6 + $0xad8] sm:$0xff]
    %v1016 = vld [vmem:[#allocation6 + $0xae0] sm:$0xff]
    %v1017 = vld [vmem:[#allocation6 + $0xae8] sm:$0xff]
    %v1018 = vld [vmem:[#allocation6 + $0xaf0] sm:$0xff]
    %v1019 = vld [vmem:[#allocation6 + $0xaf8] sm:$0xff]
    %v1020 = vld [vmem:[#allocation6 + $0xb00] sm:$0xff]
    %v1021 = vld [vmem:[#allocation6 + $0xb08] sm:$0xff]
    %v1022 = vld [vmem:[#allocation6 + $0xb10] sm:$0xff]
    %v1023 = vld [vmem:[#allocation6 + $0xb18] sm:$0xff]
    %v1024 = vld [vmem:[#allocation6 + $0xb20] sm:$0xff]
    %v1025 = vld [vmem:[#allocation6 + $0xb28] sm:$0xff]
    %v1026 = vld [vmem:[#allocation6 + $0xb30] sm:$0xff]
    %v1027 = vld [vmem:[#allocation6 + $0xb38] sm:$0xff]
    %v1028 = vld [vmem:[#allocation6 + $0xb40] sm:$0xff]
    %v1029 = vld [vmem:[#allocation6 + $0xb48] sm:$0xff]
    %v1030 = vld [vmem:[#allocation6 + $0xb50] sm:$0xff]
    %v1031 = vld [vmem:[#allocation6 + $0xb58] sm:$0xff]
    %v1032 = vld [vmem:[#allocation6 + $0xb60] sm:$0xff]
    %v1033 = vld [vmem:[#allocation6 + $0xb68] sm:$0xff]
    %v1034 = vld [vmem:[#allocation6 + $0xb70] sm:$0xff]
    %v1035 = vld [vmem:[#allocation6 + $0xb78] sm:$0xff]
    %v1036 = vld [vmem:[#allocation6 + $0xb80] sm:$0xff]
    %v1037 = vld [vmem:[#allocation6 + $0xb88] sm:$0xff]
    %v1038 = vld [vmem:[#allocation6 + $0xb90] sm:$0xff]
    %v1039 = vld [vmem:[#allocation6 + $0xb98] sm:$0xff]
    %v1040 = vld [vmem:[#allocation6 + $0xba0] sm:$0xff]
    %v1041 = vld [vmem:[#allocation6 + $0xba8] sm:$0xff]
    %v1042 = vld [vmem:[#allocation6 + $0xbb0] sm:$0xff]
    %v1043 = vld [vmem:[#allocation6 + $0xbb8] sm:$0xff]
    %v1044 = vld [vmem:[#allocation6 + $0xbc0] sm:$0xff]
    %v1045 = vld [vmem:[#allocation6 + $0xbc8] sm:$0xff]
    %v1046 = vld [vmem:[#allocation6 + $0xbd0] sm:$0xff]
    %v1047 = vld [vmem:[#allocation6 + $0xbd8] sm:$0xff]
    %v1048 = vld [vmem:[#allocation6 + $0xbe0] sm:$0xff]
    %v1049 = vld [vmem:[#allocation6 + $0xbe8] sm:$0xff]
    %v1050 = vld [vmem:[#allocation6 + $0xbf0] sm:$0xff]
    %v1051 = vld [vmem:[#allocation6 + $0xbf8] sm:$0xff]
    %v1052 = vld [vmem:[#allocation6 + $0xc00] sm:$0xff]
    %v1053 = vld [vmem:[#allocation6 + $0xc08] sm:$0xff]
    %v1054 = vld [vmem:[#allocation6 + $0xc10] sm:$0xff]
    %v1055 = vld [vmem:[#allocation6 + $0xc18] sm:$0xff]
    %v1056 = vld [vmem:[#allocation6 + $0xc20] sm:$0xff]
    %v1057 = vld [vmem:[#allocation6 + $0xc28] sm:$0xff]
    %v1058 = vld [vmem:[#allocation6 + $0xc30] sm:$0xff]
    %v1059 = vld [vmem:[#allocation6 + $0xc38] sm:$0xff]
    %v1060 = vld [vmem:[#allocation6 + $0xc40] sm:$0xff]
    %v1061 = vld [vmem:[#allocation6 + $0xc48] sm:$0xff]
    %v1062 = vld [vmem:[#allocation6 + $0xc50] sm:$0xff]
    %v1063 = vld [vmem:[#allocation6 + $0xc58] sm:$0xff]
    %v1064 = vld [vmem:[#allocation6 + $0xc60] sm:$0xff]
    %v1065 = vld [vmem:[#allocation6 + $0xc68] sm:$0xff]
    %v1066 = vld [vmem:[#allocation6 + $0xc70] sm:$0xff]
    %v1067 = vld [vmem:[#allocation6 + $0xc78] sm:$0xff]
    %v1068 = vld [vmem:[#allocation6 + $0xc80] sm:$0xff]
    %v1069 = vld [vmem:[#allocation6 + $0xc88] sm:$0xff]
    %v1070 = vld [vmem:[#allocation6 + $0xc90] sm:$0xff]
    %v1071 = vld [vmem:[#allocation6 + $0xc98] sm:$0xff]
    %v1072 = vld [vmem:[#allocation6 + $0xca0] sm:$0xff]
    %v1073 = vld [vmem:[#allocation6 + $0xca8] sm:$0xff]
    %v1074 = vld [vmem:[#allocation6 + $0xcb0] sm:$0xff]
    %v1075 = vld [vmem:[#allocation6 + $0xcb8] sm:$0xff]
    %v1076 = vld [vmem:[#allocation6 + $0xcc0] sm:$0xff]
    %v1077 = vld [vmem:[#allocation6 + $0xcc8] sm:$0xff]
    %v1078 = vld [vmem:[#allocation6 + $0xcd0] sm:$0xff]
    %v1079 = vld [vmem:[#allocation6 + $0xcd8] sm:$0xff]
    %v1080 = vld [vmem:[#allocation6 + $0xce0] sm:$0xff]
    %v1081 = vld [vmem:[#allocation6 + $0xce8] sm:$0xff]
    %v1082 = vld [vmem:[#allocation6 + $0xcf0] sm:$0xff]
    %v1083 = vld [vmem:[#allocation6 + $0xcf8] sm:$0xff]
    %v1084 = vld [vmem:[#allocation6 + $0xd00] sm:$0xff]
    %v1085 = vld [vmem:[#allocation6 + $0xd08] sm:$0xff]
    %v1086 = vld [vmem:[#allocation6 + $0xd10] sm:$0xff]
    %v1087 = vld [vmem:[#allocation6 + $0xd18] sm:$0xff]
    %v1088 = vld [vmem:[#allocation6 + $0xd20] sm:$0xff]
    %v1089 = vld [vmem:[#allocation6 + $0xd28] sm:$0xff]
    %v1090 = vld [vmem:[#allocation6 + $0xd30] sm:$0xff]
    %v1091 = vld [vmem:[#allocation6 + $0xd38] sm:$0xff]
    %v1092 = vld [vmem:[#allocation6 + $0xd40] sm:$0xff]
    %v1093 = vld [vmem:[#allocation6 + $0xd48] sm:$0xff]
    %v1094 = vld [vmem:[#allocation6 + $0xd50] sm:$0xff]
    %v1095 = vld [vmem:[#allocation6 + $0xd58] sm:$0xff]
    %v1096 = vld [vmem:[#allocation6 + $0xd60] sm:$0xff]
    %v1097 = vld [vmem:[#allocation6 + $0xd68] sm:$0xff]
    %v1098 = vld [vmem:[#allocation6 + $0xd70] sm:$0xff]
    %v1099 = vld [vmem:[#allocation6 + $0xd78] sm:$0xff]
    %v1100 = vld [vmem:[#allocation6 + $0xd80] sm:$0xff]
    %v1101 = vld [vmem:[#allocation6 + $0xd88] sm:$0xff]
    %v1102 = vld [vmem:[#allocation6 + $0xd90] sm:$0xff]
    %v1103 = vld [vmem:[#allocation6 + $0xd98] sm:$0xff]
    %v1104 = vld [vmem:[#allocation6 + $0xda0] sm:$0xff]
    %v1105 = vld [vmem:[#allocation6 + $0xda8] sm:$0xff]
    %v1106 = vld [vmem:[#allocation6 + $0xdb0] sm:$0xff]
    %v1107 = vld [vmem:[#allocation6 + $0xdb8] sm:$0xff]
    %v1108 = vld [vmem:[#allocation6 + $0xdc0] sm:$0xff]
    %v1109 = vld [vmem:[#allocation6 + $0xdc8] sm:$0xff]
    %v1110 = vld [vmem:[#allocation6 + $0xdd0] sm:$0xff]
    %v1111 = vld [vmem:[#allocation6 + $0xdd8] sm:$0xff]
    %v1112 = vld [vmem:[#allocation6 + $0xde0] sm:$0xff]
    %v1113 = vld [vmem:[#allocation6 + $0xde8] sm:$0xff]
    %v1114 = vld [vmem:[#allocation6 + $0xdf0] sm:$0xff]
    %v1115 = vld [vmem:[#allocation6 + $0xdf8] sm:$0xff]
    %v1116 = vld [vmem:[#allocation6 + $0xe00] sm:$0xff]
    %v1117 = vld [vmem:[#allocation6 + $0xe08] sm:$0xff]
    %v1118 = vld [vmem:[#allocation6 + $0xe10] sm:$0xff]
    %v1119 = vld [vmem:[#allocation6 + $0xe18] sm:$0xff]
    %v1120 = vld [vmem:[#allocation6 + $0xe20] sm:$0xff]
    %v1121 = vld [vmem:[#allocation6 + $0xe28] sm:$0xff]
    %v1122 = vld [vmem:[#allocation6 + $0xe30] sm:$0xff]
    %v1123 = vld [vmem:[#allocation6 + $0xe38] sm:$0xff]
    %v1124 = vld [vmem:[#allocation6 + $0xe40] sm:$0xff]
    %v1125 = vld [vmem:[#allocation6 + $0xe48] sm:$0xff]
    %v1126 = vld [vmem:[#allocation6 + $0xe50] sm:$0xff]
    %v1127 = vld [vmem:[#allocation6 + $0xe58] sm:$0xff]
    %v1128 = vld [vmem:[#allocation6 + $0xe60] sm:$0xff]
    %v1129 = vld [vmem:[#allocation6 + $0xe68] sm:$0xff]
    %v1130 = vld [vmem:[#allocation6 + $0xe70] sm:$0xff]
    %v1131 = vld [vmem:[#allocation6 + $0xe78] sm:$0xff]
    %v1132 = vld [vmem:[#allocation6 + $0xe80] sm:$0xff]
    %v1133 = vld [vmem:[#allocation6 + $0xe88] sm:$0xff]
    %v1134 = vld [vmem:[#allocation6 + $0xe90] sm:$0xff]
    %v1135 = vld [vmem:[#allocation6 + $0xe98] sm:$0xff]
    %v1136 = vld [vmem:[#allocation6 + $0xea0] sm:$0xff]
    %v1137 = vld [vmem:[#allocation6 + $0xea8] sm:$0xff]
    %v1138 = vld [vmem:[#allocation6 + $0xeb0] sm:$0xff]
    %v1139 = vld [vmem:[#allocation6 + $0xeb8] sm:$0xff]
    %v1140 = vld [vmem:[#allocation6 + $0xec0] sm:$0xff]
    %v1141 = vld [vmem:[#allocation6 + $0xec8] sm:$0xff]
    %v1142 = vld [vmem:[#allocation6 + $0xed0] sm:$0xff]
    %v1143 = vld [vmem:[#allocation6 + $0xed8] sm:$0xff]
    %v1144 = vld [vmem:[#allocation6 + $0xee0] sm:$0xff]
    %v1145 = vld [vmem:[#allocation6 + $0xee8] sm:$0xff]
    %v1146 = vld [vmem:[#allocation6 + $0xef0] sm:$0xff]
    %v1147 = vld [vmem:[#allocation6 + $0xef8] sm:$0xff]
    %v1148 = vld [vmem:[#allocation6 + $0xf00] sm:$0xff]
    %v1149 = vld [vmem:[#allocation6 + $0xf08] sm:$0xff]
    %v1150 = vld [vmem:[#allocation6 + $0xf10] sm:$0xff]
    %v1151 = vld [vmem:[#allocation6 + $0xf18] sm:$0xff]
    %v1152 = vld [vmem:[#allocation6 + $0xf20] sm:$0xff]
    %v1153 = vld [vmem:[#allocation6 + $0xf28] sm:$0xff]
    %v1154 = vld [vmem:[#allocation6 + $0xf30] sm:$0xff]
    %v1155 = vld [vmem:[#allocation6 + $0xf38] sm:$0xff]
    %v1156 = vld [vmem:[#allocation6 + $0xf40] sm:$0xff]
    %v1157 = vld [vmem:[#allocation6 + $0xf48] sm:$0xff]
    %v1158 = vld [vmem:[#allocation6 + $0xf50] sm:$0xff]
    %v1159 = vld [vmem:[#allocation6 + $0xf58] sm:$0xff]
    %v1160 = vld [vmem:[#allocation6 + $0xf60] sm:$0xff]
    %v1161 = vld [vmem:[#allocation6 + $0xf68] sm:$0xff]
    %v1162 = vld [vmem:[#allocation6 + $0xf70] sm:$0xff]
    %v1163 = vld [vmem:[#allocation6 + $0xf78] sm:$0xff]
    %v1164 = vld [vmem:[#allocation6 + $0xf80] sm:$0xff]
    %v1165 = vld [vmem:[#allocation6 + $0xf88] sm:$0xff]
    %v1166 = vld [vmem:[#allocation6 + $0xf90] sm:$0xff]
    %v1167 = vld [vmem:[#allocation6 + $0xf98] sm:$0xff]
    %v1168 = vld [vmem:[#allocation6 + $0xfa0] sm:$0xff]
    %v1169 = vld [vmem:[#allocation6 + $0xfa8] sm:$0xff]
    %v1170 = vld [vmem:[#allocation6 + $0xfb0] sm:$0xff]
    %v1171 = vld [vmem:[#allocation6 + $0xfb8] sm:$0xff]
    %v1172 = vld [vmem:[#allocation6 + $0xfc0] sm:$0xff]
    %v1173 = vld [vmem:[#allocation6 + $0xfc8] sm:$0xff]
    %v1174 = vld [vmem:[#allocation6 + $0xfd0] sm:$0xff]
    %v1175 = vld [vmem:[#allocation6 + $0xfd8] sm:$0xff]
    %v1176 = vld [vmem:[#allocation6 + $0xfe0] sm:$0xff]
    %v1177 = vld [vmem:[#allocation6 + $0xfe8] sm:$0xff]
    %v1178 = vld [vmem:[#allocation6 + $0xff0] sm:$0xff]
    %v1179 = vld [vmem:[#allocation6 + $0xff8] sm:$0xff]
    %v1180 = vld [vmem:[#allocation7] sm:$0xf]
    %v1182 = vlaneseq
    %v1183 = vshrl.u32 %v1182, 7
    %v1184 = vsub.s32 0, %v1183
    %v1185 = vrot.slane %v1180, %v1184
    %v1186 = vlaneseq
    %v1187 = vshrl.u32 %v1186, 7
    %v1188 = vsub.s32 1, %v1187
    %v1189 = vrot.slane %v1180, %v1188
    %v1190 = vlaneseq
    %v1191 = vshrl.u32 %v1190, 7
    %v1192 = vsub.s32 2, %v1191
    %v1193 = vrot.slane %v1180, %v1192
    %v1194 = vlaneseq
    %v1195 = vshrl.u32 %v1194, 7
    %v1196 = vsub.s32 3, %v1195
    %v1197 = vrot.slane %v1180, %v1196
    %1202 = vmatprep.subr.mxu0 %v669
    %1203 = vmatpush1.msra.mxu0 %v668
    %1204 = vmatprep.subr.mxu0 %v673
    %1205 = vmatpush1.msra.mxu0 %v672
    %1206 = vmatprep.subr.mxu0 %v677
    %1207 = vmatpush1.msra.mxu0 %v676
    %1208 = vmatprep.subr.mxu0 %v681
    %1209 = vmatpush1.msra.mxu0 %v680
    %1210 = vmatprep.subr.mxu0 %v685
    %1211 = vmatpush1.msra.mxu0 %v684
    %1212 = vmatprep.subr.mxu0 %v689
    %1213 = vmatpush1.msra.mxu0 %v688
    %1214 = vmatprep.subr.mxu0 %v693
    %1215 = vmatpush1.msra.mxu0 %v692
    %1216 = vmatprep.subr.mxu0 %v697
    %1217 = vmatpush1.msra.mxu0 %v696
    %1218 = vmatprep.subr.mxu0 %v701
    %1219 = vmatpush1.msra.mxu0 %v700
    %1220 = vmatprep.subr.mxu0 %v705
    %1221 = vmatpush1.msra.mxu0 %v704
    %1222 = vmatprep.subr.mxu0 %v709
    %1223 = vmatpush1.msra.mxu0 %v708
    %1224 = vmatprep.subr.mxu0 %v713
    %1225 = vmatpush1.msra.mxu0 %v712
    %1226 = vmatprep.subr.mxu0 %v717
    %1227 = vmatpush1.msra.mxu0 %v716
    %1228 = vmatprep.subr.mxu0 %v721
    %1229 = vmatpush1.msra.mxu0 %v720
    %1230 = vmatprep.subr.mxu0 %v725
    %1231 = vmatpush1.msra.mxu0 %v724
    %1232 = vmatprep.subr.mxu0 %v729
    %1233 = vmatpush1.msra.mxu0 %v728
    %1234 = vmatprep.subr.mxu0 %v733
    %1235 = vmatpush1.msra.mxu0 %v732
    %1236 = vmatprep.subr.mxu0 %v737
    %1237 = vmatpush1.msra.mxu0 %v736
    %1238 = vmatprep.subr.mxu0 %v741
    %1239 = vmatpush1.msra.mxu0 %v740
    %1240 = vmatprep.subr.mxu0 %v745
    %1241 = vmatpush1.msra.mxu0 %v744
    %1242 = vmatprep.subr.mxu0 %v749
    %1243 = vmatpush1.msra.mxu0 %v748
    %1244 = vmatprep.subr.mxu0 %v753
    %1245 = vmatpush1.msra.mxu0 %v752
    %1246 = vmatprep.subr.mxu0 %v757
    %1247 = vmatpush1.msra.mxu0 %v756
    %1248 = vmatprep.subr.mxu0 %v761
    %1249 = vmatpush1.msra.mxu0 %v760
    %1250 = vmatprep.subr.mxu0 %v765
    %1251 = vmatpush1.msra.mxu0 %v764
    %1252 = vmatprep.subr.mxu0 %v769
    %1253 = vmatpush1.msra.mxu0 %v768
    %1254 = vmatprep.subr.mxu0 %v773
    %1255 = vmatpush1.msra.mxu0 %v772
    %1256 = vmatprep.subr.mxu0 %v777
    %1257 = vmatpush1.msra.mxu0 %v776
    %1258 = vmatprep.subr.mxu0 %v781
    %1259 = vmatpush1.msra.mxu0 %v780
    %1260 = vmatprep.subr.mxu0 %v785
    %1261 = vmatpush1.msra.mxu0 %v784
    %1262 = vmatprep.subr.mxu0 %v789
    %1263 = vmatpush1.msra.mxu0 %v788
    %1264 = vmatprep.subr.mxu0 %v793
    %1265 = vmatpush1.msra.mxu0 %v792
    %1266 = vmatprep.mubr.f32.mxu0 %v453
    %1267 = vmatmul.mubr.f32.gmra.mrb[0].mxu0 %v451
    %v1268 = vpop.f32.mrb[0].mxu0
    %v1269 = vadd.f32 %v1185, %v1268
    %v1270 = vpop.f32.mrb[0].mxu0
    %v1271 = vadd.f32 %v1189, %v1270
    %1272 = vdwg.mxu0
    %1273 = vmatprep.subr.mxu0 %v797
    %1274 = vmatpush1.msra.mxu0 %v796
    %1275 = vmatprep.subr.mxu0 %v801
    %1276 = vmatpush1.msra.mxu0 %v800
    %1277 = vmatprep.subr.mxu0 %v805
    %1278 = vmatpush1.msra.mxu0 %v804
    %1279 = vmatprep.subr.mxu0 %v809
    %1280 = vmatpush1.msra.mxu0 %v808
    %1281 = vmatprep.subr.mxu0 %v813
    %1282 = vmatpush1.msra.mxu0 %v812
    %1283 = vmatprep.subr.mxu0 %v817
    %1284 = vmatpush1.msra.mxu0 %v816
    %1285 = vmatprep.subr.mxu0 %v821
    %1286 = vmatpush1.msra.mxu0 %v820
    %1287 = vmatprep.subr.mxu0 %v825
    %1288 = vmatpush1.msra.mxu0 %v824
    %1289 = vmatprep.subr.mxu0 %v829
    %1290 = vmatpush1.msra.mxu0 %v828
    %1291 = vmatprep.subr.mxu0 %v833
    %1292 = vmatpush1.msra.mxu0 %v832
    %1293 = vmatprep.subr.mxu0 %v837
    %1294 = vmatpush1.msra.mxu0 %v836
    %1295 = vmatprep.subr.mxu0 %v841
    %1296 = vmatpush1.msra.mxu0 %v840
    %1297 = vmatprep.subr.mxu0 %v845
    %1298 = vmatpush1.msra.mxu0 %v844
    %1299 = vmatprep.subr.mxu0 %v849
    %1300 = vmatpush1.msra.mxu0 %v848
    %1301 = vmatprep.subr.mxu0 %v853
    %1302 = vmatpush1.msra.mxu0 %v852
    %1303 = vmatprep.subr.mxu0 %v857
    %1304 = vmatpush1.msra.mxu0 %v856
    %1305 = vmatprep.subr.mxu0 %v861
    %1306 = vmatpush1.msra.mxu0 %v860
    %1307 = vmatprep.subr.mxu0 %v865
    %1308 = vmatpush1.msra.mxu0 %v864
    %1309 = vmatprep.subr.mxu0 %v869
    %1310 = vmatpush1.msra.mxu0 %v868
    %1311 = vmatprep.subr.mxu0 %v873
    %1312 = vmatpush1.msra.mxu0 %v872
    %1313 = vmatprep.subr.mxu0 %v877
    %1314 = vmatpush1.msra.mxu0 %v876
    %1315 = vmatprep.subr.mxu0 %v881
    %1316 = vmatpush1.msra.mxu0 %v880
    %1317 = vmatprep.subr.mxu0 %v885
    %1318 = vmatpush1.msra.mxu0 %v884
    %1319 = vmatprep.subr.mxu0 %v889
    %1320 = vmatpush1.msra.mxu0 %v888
    %1321 = vmatprep.subr.mxu0 %v893
    %1322 = vmatpush1.msra.mxu0 %v892
    %1323 = vmatprep.subr.mxu0 %v897
    %1324 = vmatpush1.msra.mxu0 %v896
    %1325 = vmatprep.subr.mxu0 %v901
    %1326 = vmatpush1.msra.mxu0 %v900
    %1327 = vmatprep.subr.mxu0 %v905
    %1328 = vmatpush1.msra.mxu0 %v904
    %1329 = vmatprep.subr.mxu0 %v909
    %1330 = vmatpush1.msra.mxu0 %v908
    %1331 = vmatprep.subr.mxu0 %v913
    %1332 = vmatpush1.msra.mxu0 %v912
    %1333 = vmatprep.subr.mxu0 %v917
    %1334 = vmatpush1.msra.mxu0 %v916
    %1335 = vmatprep.subr.mxu0 %v921
    %1336 = vmatpush1.msra.mxu0 %v920
    %1337 = vmatprep.mubr.f32.mxu0 %v524
    %1338 = vmatmul.mubr.f32.gmra.mrb[0].mxu0 %v522
    %v1339 = vpop.f32.mrb[0].mxu0
    %v1340 = vadd.f32 %v1269, %v1339
    %v1341 = vpop.f32.mrb[0].mxu0
    %v1342 = vadd.f32 %v1271, %v1341
    %1343 = vdwg.mxu0
    %1344 = vmatprep.subr.mxu0 %v925
    %1345 = vmatpush1.msra.mxu0 %v924
    %1346 = vmatprep.subr.mxu0 %v929
    %1347 = vmatpush1.msra.mxu0 %v928
    %1348 = vmatprep.subr.mxu0 %v933
    %1349 = vmatpush1.msra.mxu0 %v932
    %1350 = vmatprep.subr.mxu0 %v937
    %1351 = vmatpush1.msra.mxu0 %v936
    %1352 = vmatprep.subr.mxu0 %v941
    %1353 = vmatpush1.msra.mxu0 %v940
    %1354 = vmatprep.subr.mxu0 %v945
    %1355 = vmatpush1.msra.mxu0 %v944
    %1356 = vmatprep.subr.mxu0 %v949
    %1357 = vmatpush1.msra.mxu0 %v948
    %1358 = vmatprep.subr.mxu0 %v953
    %1359 = vmatpush1.msra.mxu0 %v952
    %1360 = vmatprep.subr.mxu0 %v957
    %1361 = vmatpush1.msra.mxu0 %v956
    %1362 = vmatprep.subr.mxu0 %v961
    %1363 = vmatpush1.msra.mxu0 %v960
    %1364 = vmatprep.subr.mxu0 %v965
    %1365 = vmatpush1.msra.mxu0 %v964
    %1366 = vmatprep.subr.mxu0 %v969
    %1367 = vmatpush1.msra.mxu0 %v968
    %1368 = vmatprep.subr.mxu0 %v973
    %1369 = vmatpush1.msra.mxu0 %v972
    %1370 = vmatprep.subr.mxu0 %v977
    %1371 = vmatpush1.msra.mxu0 %v976
    %1372 = vmatprep.subr.mxu0 %v981
    %1373 = vmatpush1.msra.mxu0 %v980
    %1374 = vmatprep.subr.mxu0 %v985
    %1375 = vmatpush1.msra.mxu0 %v984
    %1376 = vmatprep.subr.mxu0 %v989
    %1377 = vmatpush1.msra.mxu0 %v988
    %1378 = vmatprep.subr.mxu0 %v993
    %1379 = vmatpush1.msra.mxu0 %v992
    %1380 = vmatprep.subr.mxu0 %v997
    %1381 = vmatpush1.msra.mxu0 %v996
    %1382 = vmatprep.subr.mxu0 %v1001
    %1383 = vmatpush1.msra.mxu0 %v1000
    %1384 = vmatprep.subr.mxu0 %v1005
    %1385 = vmatpush1.msra.mxu0 %v1004
    %1386 = vmatprep.subr.mxu0 %v1009
    %1387 = vmatpush1.msra.mxu0 %v1008
    %1388 = vmatprep.subr.mxu0 %v1013
    %1389 = vmatpush1.msra.mxu0 %v1012
    %1390 = vmatprep.subr.mxu0 %v1017
    %1391 = vmatpush1.msra.mxu0 %v1016
    %1392 = vmatprep.subr.mxu0 %v1021
    %1393 = vmatpush1.msra.mxu0 %v1020
    %1394 = vmatprep.subr.mxu0 %v1025
    %1395 = vmatpush1.msra.mxu0 %v1024
    %1396 = vmatprep.subr.mxu0 %v1029
    %1397 = vmatpush1.msra.mxu0 %v1028
    %1398 = vmatprep.subr.mxu0 %v1033
    %1399 = vmatpush1.msra.mxu0 %v1032
    %1400 = vmatprep.subr.mxu0 %v1037
    %1401 = vmatpush1.msra.mxu0 %v1036
    %1402 = vmatprep.subr.mxu0 %v1041
    %1403 = vmatpush1.msra.mxu0 %v1040
    %1404 = vmatprep.subr.mxu0 %v1045
    %1405 = vmatpush1.msra.mxu0 %v1044
    %1406 = vmatprep.subr.mxu0 %v1049
    %1407 = vmatpush1.msra.mxu0 %v1048
    %1408 = vmatprep.mubr.f32.mxu0 %v595
    %1409 = vmatmul.mubr.f32.gmra.mrb[0].mxu0 %v593
    %v1410 = vpop.f32.mrb[0].mxu0
    %v1411 = vadd.f32 %v1340, %v1410
    %v1412 = vpop.f32.mrb[0].mxu0
    %v1413 = vadd.f32 %v1342, %v1412
    %1414 = vdwg.mxu0
    %1415 = vmatprep.subr.mxu0 %v1053
    %1416 = vmatpush1.msra.mxu0 %v1052
    %1417 = vmatprep.subr.mxu0 %v1057
    %1418 = vmatpush1.msra.mxu0 %v1056
    %1419 = vmatprep.subr.mxu0 %v1061
    %1420 = vmatpush1.msra.mxu0 %v1060
    %1421 = vmatprep.subr.mxu0 %v1065
    %1422 = vmatpush1.msra.mxu0 %v1064
    %1423 = vmatprep.subr.mxu0 %v1069
    %1424 = vmatpush1.msra.mxu0 %v1068
    %1425 = vmatprep.subr.mxu0 %v1073
    %1426 = vmatpush1.msra.mxu0 %v1072
    %1427 = vmatprep.subr.mxu0 %v1077
    %1428 = vmatpush1.msra.mxu0 %v1076
    %1429 = vmatprep.subr.mxu0 %v1081
    %1430 = vmatpush1.msra.mxu0 %v1080
    %1431 = vmatprep.subr.mxu0 %v1085
    %1432 = vmatpush1.msra.mxu0 %v1084
    %1433 = vmatprep.subr.mxu0 %v1089
    %1434 = vmatpush1.msra.mxu0 %v1088
    %1435 = vmatprep.subr.mxu0 %v1093
    %1436 = vmatpush1.msra.mxu0 %v1092
    %1437 = vmatprep.subr.mxu0 %v1097
    %1438 = vmatpush1.msra.mxu0 %v1096
    %1439 = vmatprep.subr.mxu0 %v1101
    %1440 = vmatpush1.msra.mxu0 %v1100
    %1441 = vmatprep.subr.mxu0 %v1105
    %1442 = vmatpush1.msra.mxu0 %v1104
    %1443 = vmatprep.subr.mxu0 %v1109
    %1444 = vmatpush1.msra.mxu0 %v1108
    %1445 = vmatprep.subr.mxu0 %v1113
    %1446 = vmatpush1.msra.mxu0 %v1112
    %1447 = vmatprep.subr.mxu0 %v1117
    %1448 = vmatpush1.msra.mxu0 %v1116
    %1449 = vmatprep.subr.mxu0 %v1121
    %1450 = vmatpush1.msra.mxu0 %v1120
    %1451 = vmatprep.subr.mxu0 %v1125
    %1452 = vmatpush1.msra.mxu0 %v1124
    %1453 = vmatprep.subr.mxu0 %v1129
    %1454 = vmatpush1.msra.mxu0 %v1128
    %1455 = vmatprep.subr.mxu0 %v1133
    %1456 = vmatpush1.msra.mxu0 %v1132
    %1457 = vmatprep.subr.mxu0 %v1137
    %1458 = vmatpush1.msra.mxu0 %v1136
    %1459 = vmatprep.subr.mxu0 %v1141
    %1460 = vmatpush1.msra.mxu0 %v1140
    %1461 = vmatprep.subr.mxu0 %v1145
    %1462 = vmatpush1.msra.mxu0 %v1144
    %1463 = vmatprep.subr.mxu0 %v1149
    %1464 = vmatpush1.msra.mxu0 %v1148
    %1465 = vmatprep.subr.mxu0 %v1153
    %1466 = vmatpush1.msra.mxu0 %v1152
    %1467 = vmatprep.subr.mxu0 %v1157
    %1468 = vmatpush1.msra.mxu0 %v1156
    %1469 = vmatprep.subr.mxu0 %v1161
    %1470 = vmatpush1.msra.mxu0 %v1160
    %1471 = vmatprep.subr.mxu0 %v1165
    %1472 = vmatpush1.msra.mxu0 %v1164
    %1473 = vmatprep.subr.mxu0 %v1169
    %1474 = vmatpush1.msra.mxu0 %v1168
    %1475 = vmatprep.subr.mxu0 %v1173
    %1476 = vmatpush1.msra.mxu0 %v1172
    %1477 = vmatprep.subr.mxu0 %v1177
    %1478 = vmatpush1.msra.mxu0 %v1176
    %1479 = vmatprep.mubr.f32.mxu0 %v666
    %1480 = vmatmul.mubr.f32.gmra.mrb[0].mxu0 %v664
    %v1481 = vpop.f32.mrb[0].mxu0
    %v1482 = vadd.f32 %v1411, %v1481
    %v1483 = vpop.f32.mrb[0].mxu0
    %v1484 = vadd.f32 %v1413, %v1483
    %1485 = vdwg.mxu0
    %1486 = vmatprep.subr.mxu0 %v671
    %1487 = vmatpush1.msra.mxu0 %v670
    %1488 = vmatprep.subr.mxu0 %v675
    %1489 = vmatpush1.msra.mxu0 %v674
    %1490 = vmatprep.subr.mxu0 %v679
    %1491 = vmatpush1.msra.mxu0 %v678
    %1492 = vmatprep.subr.mxu0 %v683
    %1493 = vmatpush1.msra.mxu0 %v682
    %1494 = vmatprep.subr.mxu0 %v687
    %1495 = vmatpush1.msra.mxu0 %v686
    %1496 = vmatprep.subr.mxu0 %v691
    %1497 = vmatpush1.msra.mxu0 %v690
    %1498 = vmatprep.subr.mxu0 %v695
    %1499 = vmatpush1.msra.mxu0 %v694
    %1500 = vmatprep.subr.mxu0 %v699
    %1501 = vmatpush1.msra.mxu0 %v698
    %1502 = vmatprep.subr.mxu0 %v703
    %1503 = vmatpush1.msra.mxu0 %v702
    %1504 = vmatprep.subr.mxu0 %v707
    %1505 = vmatpush1.msra.mxu0 %v706
    %1506 = vmatprep.subr.mxu0 %v711
    %1507 = vmatpush1.msra.mxu0 %v710
    %1508 = vmatprep.subr.mxu0 %v715
    %1509 = vmatpush1.msra.mxu0 %v714
    %1510 = vmatprep.subr.mxu0 %v719
    %1511 = vmatpush1.msra.mxu0 %v718
    %1512 = vmatprep.subr.mxu0 %v723
    %1513 = vmatpush1.msra.mxu0 %v722
    %1514 = vmatprep.subr.mxu0 %v727
    %1515 = vmatpush1.msra.mxu0 %v726
    %1516 = vmatprep.subr.mxu0 %v731
    %1517 = vmatpush1.msra.mxu0 %v730
    %1518 = vmatprep.subr.mxu0 %v735
    %1519 = vmatpush1.msra.mxu0 %v734
    %1520 = vmatprep.subr.mxu0 %v739
    %1521 = vmatpush1.msra.mxu0 %v738
    %1522 = vmatprep.subr.mxu0 %v743
    %1523 = vmatpush1.msra.mxu0 %v742
    %1524 = vmatprep.subr.mxu0 %v747
    %1525 = vmatpush1.msra.mxu0 %v746
    %1526 = vmatprep.subr.mxu0 %v751
    %1527 = vmatpush1.msra.mxu0 %v750
    %1528 = vmatprep.subr.mxu0 %v755
    %1529 = vmatpush1.msra.mxu0 %v754
    %1530 = vmatprep.subr.mxu0 %v759
    %1531 = vmatpush1.msra.mxu0 %v758
    %1532 = vmatprep.subr.mxu0 %v763
    %1533 = vmatpush1.msra.mxu0 %v762
    %1534 = vmatprep.subr.mxu0 %v767
    %1535 = vmatpush1.msra.mxu0 %v766
    %1536 = vmatprep.subr.mxu0 %v771
    %1537 = vmatpush1.msra.mxu0 %v770
    %1538 = vmatprep.subr.mxu0 %v775
    %1539 = vmatpush1.msra.mxu0 %v774
    %1540 = vmatprep.subr.mxu0 %v779
    %1541 = vmatpush1.msra.mxu0 %v778
    %1542 = vmatprep.subr.mxu0 %v783
    %1543 = vmatpush1.msra.mxu0 %v782
    %1544 = vmatprep.subr.mxu0 %v787
    %1545 = vmatpush1.msra.mxu0 %v786
    %1546 = vmatprep.subr.mxu0 %v791
    %1547 = vmatpush1.msra.mxu0 %v790
    %1548 = vmatprep.subr.mxu0 %v795
    %1549 = vmatpush1.msra.mxu0 %v794
    %1550 = vmatprep.mubr.f32.mxu0 %v453
    %1551 = vmatmul.mubr.f32.gmra.mrb[0].mxu0 %v451
    %v1552 = vpop.f32.mrb[0].mxu0
    %v1553 = vadd.f32 %v1193, %v1552
    %v1554 = vpop.f32.mrb[0].mxu0
    %v1555 = vadd.f32 %v1197, %v1554
    %1556 = vdwg.mxu0
    %1557 = vmatprep.subr.mxu0 %v799
    %1558 = vmatpush1.msra.mxu0 %v798
    %1559 = vmatprep.subr.mxu0 %v803
    %1560 = vmatpush1.msra.mxu0 %v802
    %1561 = vmatprep.subr.mxu0 %v807
    %1562 = vmatpush1.msra.mxu0 %v806
    %1563 = vmatprep.subr.mxu0 %v811
    %1564 = vmatpush1.msra.mxu0 %v810
    %1565 = vmatprep.subr.mxu0 %v815
    %1566 = vmatpush1.msra.mxu0 %v814
    %1567 = vmatprep.subr.mxu0 %v819
    %1568 = vmatpush1.msra.mxu0 %v818
    %1569 = vmatprep.subr.mxu0 %v823
    %1570 = vmatpush1.msra.mxu0 %v822
    %1571 = vmatprep.subr.mxu0 %v827
    %1572 = vmatpush1.msra.mxu0 %v826
    %1573 = vmatprep.subr.mxu0 %v831
    %1574 = vmatpush1.msra.mxu0 %v830
    %1575 = vmatprep.subr.mxu0 %v835
    %1576 = vmatpush1.msra.mxu0 %v834
    %1577 = vmatprep.subr.mxu0 %v839
    %1578 = vmatpush1.msra.mxu0 %v838
    %1579 = vmatprep.subr.mxu0 %v843
    %1580 = vmatpush1.msra.mxu0 %v842
    %1581 = vmatprep.subr.mxu0 %v847
    %1582 = vmatpush1.msra.mxu0 %v846
    %1583 = vmatprep.subr.mxu0 %v851
    %1584 = vmatpush1.msra.mxu0 %v850
    %1585 = vmatprep.subr.mxu0 %v855
    %1586 = vmatpush1.msra.mxu0 %v854
    %1587 = vmatprep.subr.mxu0 %v859
    %1588 = vmatpush1.msra.mxu0 %v858
    %1589 = vmatprep.subr.mxu0 %v863
    %1590 = vmatpush1.msra.mxu0 %v862
    %1591 = vmatprep.subr.mxu0 %v867
    %1592 = vmatpush1.msra.mxu0 %v866
    %1593 = vmatprep.subr.mxu0 %v871
    %1594 = vmatpush1.msra.mxu0 %v870
    %1595 = vmatprep.subr.mxu0 %v875
    %1596 = vmatpush1.msra.mxu0 %v874
    %1597 = vmatprep.subr.mxu0 %v879
    %1598 = vmatpush1.msra.mxu0 %v878
    %1599 = vmatprep.subr.mxu0 %v883
    %1600 = vmatpush1.msra.mxu0 %v882
    %1601 = vmatprep.subr.mxu0 %v887
    %1602 = vmatpush1.msra.mxu0 %v886
    %1603 = vmatprep.subr.mxu0 %v891
    %1604 = vmatpush1.msra.mxu0 %v890
    %1605 = vmatprep.subr.mxu0 %v895
    %1606 = vmatpush1.msra.mxu0 %v894
    %1607 = vmatprep.subr.mxu0 %v899
    %1608 = vmatpush1.msra.mxu0 %v898
    %1609 = vmatprep.subr.mxu0 %v903
    %1610 = vmatpush1.msra.mxu0 %v902
    %1611 = vmatprep.subr.mxu0 %v907
    %1612 = vmatpush1.msra.mxu0 %v906
    %1613 = vmatprep.subr.mxu0 %v911
    %1614 = vmatpush1.msra.mxu0 %v910
    %1615 = vmatprep.subr.mxu0 %v915
    %1616 = vmatpush1.msra.mxu0 %v914
    %1617 = vmatprep.subr.mxu0 %v919
    %1618 = vmatpush1.msra.mxu0 %v918
    %1619 = vmatprep.subr.mxu0 %v923
    %1620 = vmatpush1.msra.mxu0 %v922
    %1621 = vmatprep.mubr.f32.mxu0 %v524
    %1622 = vmatmul.mubr.f32.gmra.mrb[0].mxu0 %v522
    %v1623 = vpop.f32.mrb[0].mxu0
    %v1624 = vadd.f32 %v1553, %v1623
    %v1625 = vpop.f32.mrb[0].mxu0
    %v1626 = vadd.f32 %v1555, %v1625
    %1627 = vdwg.mxu0
    %1628 = vmatprep.subr.mxu0 %v927
    %1629 = vmatpush1.msra.mxu0 %v926
    %1630 = vmatprep.subr.mxu0 %v931
    %1631 = vmatpush1.msra.mxu0 %v930
    %1632 = vmatprep.subr.mxu0 %v935
    %1633 = vmatpush1.msra.mxu0 %v934
    %1634 = vmatprep.subr.mxu0 %v939
    %1635 = vmatpush1.msra.mxu0 %v938
    %1636 = vmatprep.subr.mxu0 %v943
    %1637 = vmatpush1.msra.mxu0 %v942
    %1638 = vmatprep.subr.mxu0 %v947
    %1639 = vmatpush1.msra.mxu0 %v946
    %1640 = vmatprep.subr.mxu0 %v951
    %1641 = vmatpush1.msra.mxu0 %v950
    %1642 = vmatprep.subr.mxu0 %v955
    %1643 = vmatpush1.msra.mxu0 %v954
    %1644 = vmatprep.subr.mxu0 %v959
    %1645 = vmatpush1.msra.mxu0 %v958
    %1646 = vmatprep.subr.mxu0 %v963
    %1647 = vmatpush1.msra.mxu0 %v962
    %1648 = vmatprep.subr.mxu0 %v967
    %1649 = vmatpush1.msra.mxu0 %v966
    %1650 = vmatprep.subr.mxu0 %v971
    %1651 = vmatpush1.msra.mxu0 %v970
    %1652 = vmatprep.subr.mxu0 %v975
    %1653 = vmatpush1.msra.mxu0 %v974
    %1654 = vmatprep.subr.mxu0 %v979
    %1655 = vmatpush1.msra.mxu0 %v978
    %1656 = vmatprep.subr.mxu0 %v983
    %1657 = vmatpush1.msra.mxu0 %v982
    %1658 = vmatprep.subr.mxu0 %v987
    %1659 = vmatpush1.msra.mxu0 %v986
    %1660 = vmatprep.subr.mxu0 %v991
    %1661 = vmatpush1.msra.mxu0 %v990
    %1662 = vmatprep.subr.mxu0 %v995
    %1663 = vmatpush1.msra.mxu0 %v994
    %1664 = vmatprep.subr.mxu0 %v999
    %1665 = vmatpush1.msra.mxu0 %v998
    %1666 = vmatprep.subr.mxu0 %v1003
    %1667 = vmatpush1.msra.mxu0 %v1002
    %1668 = vmatprep.subr.mxu0 %v1007
    %1669 = vmatpush1.msra.mxu0 %v1006
    %1670 = vmatprep.subr.mxu0 %v1011
    %1671 = vmatpush1.msra.mxu0 %v1010
    %1672 = vmatprep.subr.mxu0 %v1015
    %1673 = vmatpush1.msra.mxu0 %v1014
    %1674 = vmatprep.subr.mxu0 %v1019
    %1675 = vmatpush1.msra.mxu0 %v1018
    %1676 = vmatprep.subr.mxu0 %v1023
    %1677 = vmatpush1.msra.mxu0 %v1022
    %1678 = vmatprep.subr.mxu0 %v1027
    %1679 = vmatpush1.msra.mxu0 %v1026
    %1680 = vmatprep.subr.mxu0 %v1031
    %1681 = vmatpush1.msra.mxu0 %v1030
    %1682 = vmatprep.subr.mxu0 %v1035
    %1683 = vmatpush1.msra.mxu0 %v1034
    %1684 = vmatprep.subr.mxu0 %v1039
    %1685 = vmatpush1.msra.mxu0 %v1038
    %1686 = vmatprep.subr.mxu0 %v1043
    %1687 = vmatpush1.msra.mxu0 %v1042
    %1688 = vmatprep.subr.mxu0 %v1047
    %1689 = vmatpush1.msra.mxu0 %v1046
    %1690 = vmatprep.subr.mxu0 %v1051
    %1691 = vmatpush1.msra.mxu0 %v1050
    %1692 = vmatprep.mubr.f32.mxu0 %v595
    %1693 = vmatmul.mubr.f32.gmra.mrb[0].mxu0 %v593
    %v1694 = vpop.f32.mrb[0].mxu0
    %v1695 = vadd.f32 %v1624, %v1694
    %v1696 = vpop.f32.mrb[0].mxu0
    %v1697 = vadd.f32 %v1626, %v1696
    %1698 = vdwg.mxu0
    %1699 = vmatprep.subr.mxu0 %v1055
    %1700 = vmatpush1.msra.mxu0 %v1054
    %1701 = vmatprep.subr.mxu0 %v1059
    %1702 = vmatpush1.msra.mxu0 %v1058
    %1703 = vmatprep.subr.mxu0 %v1063
    %1704 = vmatpush1.msra.mxu0 %v1062
    %1705 = vmatprep.subr.mxu0 %v1067
    %1706 = vmatpush1.msra.mxu0 %v1066
    %1707 = vmatprep.subr.mxu0 %v1071
    %1708 = vmatpush1.msra.mxu0 %v1070
    %1709 = vmatprep.subr.mxu0 %v1075
    %1710 = vmatpush1.msra.mxu0 %v1074
    %1711 = vmatprep.subr.mxu0 %v1079
    %1712 = vmatpush1.msra.mxu0 %v1078
    %1713 = vmatprep.subr.mxu0 %v1083
    %1714 = vmatpush1.msra.mxu0 %v1082
    %1715 = vmatprep.subr.mxu0 %v1087
    %1716 = vmatpush1.msra.mxu0 %v1086
    %1717 = vmatprep.subr.mxu0 %v1091
    %1718 = vmatpush1.msra.mxu0 %v1090
    %1719 = vmatprep.subr.mxu0 %v1095
    %1720 = vmatpush1.msra.mxu0 %v1094
    %1721 = vmatprep.subr.mxu0 %v1099
    %1722 = vmatpush1.msra.mxu0 %v1098
    %1723 = vmatprep.subr.mxu0 %v1103
    %1724 = vmatpush1.msra.mxu0 %v1102
    %1725 = vmatprep.subr.mxu0 %v1107
    %1726 = vmatpush1.msra.mxu0 %v1106
    %1727 = vmatprep.subr.mxu0 %v1111
    %1728 = vmatpush1.msra.mxu0 %v1110
    %1729 = vmatprep.subr.mxu0 %v1115
    %1730 = vmatpush1.msra.mxu0 %v1114
    %1731 = vmatprep.subr.mxu0 %v1119
    %1732 = vmatpush1.msra.mxu0 %v1118
    %1733 = vmatprep.subr.mxu0 %v1123
    %1734 = vmatpush1.msra.mxu0 %v1122
    %1735 = vmatprep.subr.mxu0 %v1127
    %1736 = vmatpush1.msra.mxu0 %v1126
    %1737 = vmatprep.subr.mxu0 %v1131
    %1738 = vmatpush1.msra.mxu0 %v1130
    %1739 = vmatprep.subr.mxu0 %v1135
    %1740 = vmatpush1.msra.mxu0 %v1134
    %1741 = vmatprep.subr.mxu0 %v1139
    %1742 = vmatpush1.msra.mxu0 %v1138
    %1743 = vmatprep.subr.mxu0 %v1143
    %1744 = vmatpush1.msra.mxu0 %v1142
    %1745 = vmatprep.subr.mxu0 %v1147
    %1746 = vmatpush1.msra.mxu0 %v1146
    %1747 = vmatprep.subr.mxu0 %v1151
    %1748 = vmatpush1.msra.mxu0 %v1150
    %1749 = vmatprep.subr.mxu0 %v1155
    %1750 = vmatpush1.msra.mxu0 %v1154
    %1751 = vmatprep.subr.mxu0 %v1159
    %1752 = vmatpush1.msra.mxu0 %v1158
    %1753 = vmatprep.subr.mxu0 %v1163
    %1754 = vmatpush1.msra.mxu0 %v1162
    %1755 = vmatprep.subr.mxu0 %v1167
    %1756 = vmatpush1.msra.mxu0 %v1166
    %1757 = vmatprep.subr.mxu0 %v1171
    %1758 = vmatpush1.msra.mxu0 %v1170
    %1759 = vmatprep.subr.mxu0 %v1175
    %1760 = vmatpush1.msra.mxu0 %v1174
    %1761 = vmatprep.subr.mxu0 %v1179
    %1762 = vmatpush1.msra.mxu0 %v1178
    %1763 = vmatprep.mubr.f32.mxu0 %v666
    %1764 = vmatmul.mubr.f32.gmra.mrb[0].mxu0 %v664
    %v1765 = vpop.f32.mrb[0].mxu0
    %v1766 = vadd.f32 %v1695, %v1765
    %v1767 = vpop.f32.mrb[0].mxu0
    %v1768 = vadd.f32 %v1697, %v1767
    %1769 = vdwg.mxu0
    %v1770 = vmax.f32 %v1482, 0.0
    %v1771 = vmax.f32 %v1484, 0.0
    %v1772 = vld [vmem:[#allocation9] sm:$0xff]
    %v1773 = vld [vmem:[#allocation9 + $0x8] sm:$0xff]
    %v1774 = vld [vmem:[#allocation9 + $0x10] sm:$0xff]
    %v1775 = vld [vmem:[#allocation9 + $0x18] sm:$0xff]
    %v1776 = vld [vmem:[#allocation9 + $0x20] sm:$0xff]
    %v1777 = vld [vmem:[#allocation9 + $0x28] sm:$0xff]
    %v1778 = vld [vmem:[#allocation9 + $0x30] sm:$0xff]
    %v1779 = vld [vmem:[#allocation9 + $0x38] sm:$0xff]
    %v1780 = vld [vmem:[#allocation9 + $0x40] sm:$0xff]
    %v1781 = vld [vmem:[#allocation9 + $0x48] sm:$0xff]
    %v1782 = vld [vmem:[#allocation9 + $0x50] sm:$0xff]
    %v1783 = vld [vmem:[#allocation9 + $0x58] sm:$0xff]
    %v1784 = vld [vmem:[#allocation9 + $0x60] sm:$0xff]
    %v1785 = vld [vmem:[#allocation9 + $0x68] sm:$0xff]
    %v1786 = vld [vmem:[#allocation9 + $0x70] sm:$0xff]
    %v1787 = vld [vmem:[#allocation9 + $0x78] sm:$0xff]
    %v1788 = vld [vmem:[#allocation9 + $0x80] sm:$0xff]
    %v1789 = vld [vmem:[#allocation9 + $0x88] sm:$0xff]
    %v1790 = vld [vmem:[#allocation9 + $0x90] sm:$0xff]
    %v1791 = vld [vmem:[#allocation9 + $0x98] sm:$0xff]
    %v1792 = vld [vmem:[#allocation9 + $0xa0] sm:$0xff]
    %v1793 = vld [vmem:[#allocation9 + $0xa8] sm:$0xff]
    %v1794 = vld [vmem:[#allocation9 + $0xb0] sm:$0xff]
    %v1795 = vld [vmem:[#allocation9 + $0xb8] sm:$0xff]
    %v1796 = vld [vmem:[#allocation9 + $0xc0] sm:$0xff]
    %v1797 = vld [vmem:[#allocation9 + $0xc8] sm:$0xff]
    %v1798 = vld [vmem:[#allocation9 + $0xd0] sm:$0xff]
    %v1799 = vld [vmem:[#allocation9 + $0xd8] sm:$0xff]
    %v1800 = vld [vmem:[#allocation9 + $0xe0] sm:$0xff]
    %v1801 = vld [vmem:[#allocation9 + $0xe8] sm:$0xff]
    %v1802 = vld [vmem:[#allocation9 + $0xf0] sm:$0xff]
    %v1803 = vld [vmem:[#allocation9 + $0xf8] sm:$0xff]
    %v1804 = vld [vmem:[#allocation9 + $0x100] sm:$0xff]
    %v1805 = vld [vmem:[#allocation9 + $0x108] sm:$0xff]
    %v1806 = vld [vmem:[#allocation9 + $0x110] sm:$0xff]
    %v1807 = vld [vmem:[#allocation9 + $0x118] sm:$0xff]
    %v1808 = vld [vmem:[#allocation9 + $0x120] sm:$0xff]
    %v1809 = vld [vmem:[#allocation9 + $0x128] sm:$0xff]
    %v1810 = vld [vmem:[#allocation9 + $0x130] sm:$0xff]
    %v1811 = vld [vmem:[#allocation9 + $0x138] sm:$0xff]
    %v1812 = vld [vmem:[#allocation9 + $0x140] sm:$0xff]
    %v1813 = vld [vmem:[#allocation9 + $0x148] sm:$0xff]
    %v1814 = vld [vmem:[#allocation9 + $0x150] sm:$0xff]
    %v1815 = vld [vmem:[#allocation9 + $0x158] sm:$0xff]
    %v1816 = vld [vmem:[#allocation9 + $0x160] sm:$0xff]
    %v1817 = vld [vmem:[#allocation9 + $0x168] sm:$0xff]
    %v1818 = vld [vmem:[#allocation9 + $0x170] sm:$0xff]
    %v1819 = vld [vmem:[#allocation9 + $0x178] sm:$0xff]
    %v1820 = vld [vmem:[#allocation9 + $0x180] sm:$0xff]
    %v1821 = vld [vmem:[#allocation9 + $0x188] sm:$0xff]
    %v1822 = vld [vmem:[#allocation9 + $0x190] sm:$0xff]
    %v1823 = vld [vmem:[#allocation9 + $0x198] sm:$0xff]
    %v1824 = vld [vmem:[#allocation9 + $0x1a0] sm:$0xff]
    %v1825 = vld [vmem:[#allocation9 + $0x1a8] sm:$0xff]
    %v1826 = vld [vmem:[#allocation9 + $0x1b0] sm:$0xff]
    %v1827 = vld [vmem:[#allocation9 + $0x1b8] sm:$0xff]
    %v1828 = vld [vmem:[#allocation9 + $0x1c0] sm:$0xff]
    %v1829 = vld [vmem:[#allocation9 + $0x1c8] sm:$0xff]
    %v1830 = vld [vmem:[#allocation9 + $0x1d0] sm:$0xff]
    %v1831 = vld [vmem:[#allocation9 + $0x1d8] sm:$0xff]
    %v1832 = vld [vmem:[#allocation9 + $0x1e0] sm:$0xff]
    %v1833 = vld [vmem:[#allocation9 + $0x1e8] sm:$0xff]
    %v1834 = vld [vmem:[#allocation9 + $0x1f0] sm:$0xff]
    %v1835 = vld [vmem:[#allocation9 + $0x1f8] sm:$0xff]
    %v1836 = vld [vmem:[#allocation10] sm:$0x3]
    %v1838 = vlaneseq
    %v1839 = vshrl.u32 %v1838, 7
    %v1840 = vsub.s32 0, %v1839
    %v1841 = vrot.slane %v1836, %v1840
    %v1842 = vlaneseq
    %v1843 = vshrl.u32 %v1842, 7
    %v1844 = vsub.s32 1, %v1843
    %v1845 = vrot.slane %v1836, %v1844
    %1848 = vmatprep.subr.mxu0 %v1773
    %1849 = vmatpush1.msra.mxu0 %v1772
    %1850 = vmatprep.subr.mxu0 %v1775
    %1851 = vmatpush1.msra.mxu0 %v1774
    %1852 = vmatprep.subr.mxu0 %v1777
    %1853 = vmatpush1.msra.mxu0 %v1776
    %1854 = vmatprep.subr.mxu0 %v1779
    %1855 = vmatpush1.msra.mxu0 %v1778
    %1856 = vmatprep.subr.mxu0 %v1781
    %1857 = vmatpush1.msra.mxu0 %v1780
    %1858 = vmatprep.subr.mxu0 %v1783
    %1859 = vmatpush1.msra.mxu0 %v1782
    %1860 = vmatprep.subr.mxu0 %v1785
    %1861 = vmatpush1.msra.mxu0 %v1784
    %1862 = vmatprep.subr.mxu0 %v1787
    %1863 = vmatpush1.msra.mxu0 %v1786
    %1864 = vmatprep.subr.mxu0 %v1789
    %1865 = vmatpush1.msra.mxu0 %v1788
    %1866 = vmatprep.subr.mxu0 %v1791
    %1867 = vmatpush1.msra.mxu0 %v1790
    %1868 = vmatprep.subr.mxu0 %v1793
    %1869 = vmatpush1.msra.mxu0 %v1792
    %1870 = vmatprep.subr.mxu0 %v1795
    %1871 = vmatpush1.msra.mxu0 %v1794
    %1872 = vmatprep.subr.mxu0 %v1797
    %1873 = vmatpush1.msra.mxu0 %v1796
    %1874 = vmatprep.subr.mxu0 %v1799
    %1875 = vmatpush1.msra.mxu0 %v1798
    %1876 = vmatprep.subr.mxu0 %v1801
    %1877 = vmatpush1.msra.mxu0 %v1800
    %1878 = vmatprep.subr.mxu0 %v1803
    %1879 = vmatpush1.msra.mxu0 %v1802
    %1880 = vmatprep.subr.mxu0 %v1805
    %1881 = vmatpush1.msra.mxu0 %v1804
    %1882 = vmatprep.subr.mxu0 %v1807
    %1883 = vmatpush1.msra.mxu0 %v1806
    %1884 = vmatprep.subr.mxu0 %v1809
    %1885 = vmatpush1.msra.mxu0 %v1808
    %1886 = vmatprep.subr.mxu0 %v1811
    %1887 = vmatpush1.msra.mxu0 %v1810
    %1888 = vmatprep.subr.mxu0 %v1813
    %1889 = vmatpush1.msra.mxu0 %v1812
    %1890 = vmatprep.subr.mxu0 %v1815
    %1891 = vmatpush1.msra.mxu0 %v1814
    %1892 = vmatprep.subr.mxu0 %v1817
    %1893 = vmatpush1.msra.mxu0 %v1816
    %1894 = vmatprep.subr.mxu0 %v1819
    %1895 = vmatpush1.msra.mxu0 %v1818
    %1896 = vmatprep.subr.mxu0 %v1821
    %1897 = vmatpush1.msra.mxu0 %v1820
    %1898 = vmatprep.subr.mxu0 %v1823
    %1899 = vmatpush1.msra.mxu0 %v1822
    %1900 = vmatprep.subr.mxu0 %v1825
    %1901 = vmatpush1.msra.mxu0 %v1824
    %1902 = vmatprep.subr.mxu0 %v1827
    %1903 = vmatpush1.msra.mxu0 %v1826
    %1904 = vmatprep.subr.mxu0 %v1829
    %1905 = vmatpush1.msra.mxu0 %v1828
    %1906 = vmatprep.subr.mxu0 %v1831
    %1907 = vmatpush1.msra.mxu0 %v1830
    %1908 = vmatprep.subr.mxu0 %v1833
    %1909 = vmatpush1.msra.mxu0 %v1832
    %1910 = vmatprep.subr.mxu0 %v1835
    %1911 = vmatpush1.msra.mxu0 %v1834
    %1912 = vmatprep.mubr.f32.mxu0 %v1771
    %1913 = vmatmul.mubr.f32.gmra.mrb[0].mxu0 %v1770
    %v1914 = vpop.f32.mrb[0].mxu0
    %v1915 = vadd.f32 %v1841, %v1914
    %v1916 = vpop.f32.mrb[0].mxu0
    %v1917 = vadd.f32 %v1845, %v1916
    %1918 = vdwg.mxu0
    %v1919 = vmax.f32 %v1915, 0.0
    %v1920 = vmax.f32 %v1917, 0.0
    %v1921 = vld [vmem:[#allocation12] sm:$0xff]
    %v1922 = vld [vmem:[#allocation12 + $0x8] sm:$0xff]
    %v1923 = vld [vmem:[#allocation12 + $0x10] sm:$0xff]
    %v1924 = vld [vmem:[#allocation12 + $0x18] sm:$0xff]
    %v1925 = vld [vmem:[#allocation12 + $0x20] sm:$0xff]
    %v1926 = vld [vmem:[#allocation12 + $0x28] sm:$0xff]
    %v1927 = vld [vmem:[#allocation12 + $0x30] sm:$0xff]
    %v1928 = vld [vmem:[#allocation12 + $0x38] sm:$0xff]
    %v1929 = vld [vmem:[#allocation12 + $0x40] sm:$0xff]
    %v1930 = vld [vmem:[#allocation12 + $0x48] sm:$0xff]
    %v1931 = vld [vmem:[#allocation12 + $0x50] sm:$0xff]
    %v1932 = vld [vmem:[#allocation12 + $0x58] sm:$0xff]
    %v1933 = vld [vmem:[#allocation12 + $0x60] sm:$0xff]
    %v1934 = vld [vmem:[#allocation12 + $0x68] sm:$0xff]
    %v1935 = vld [vmem:[#allocation12 + $0x70] sm:$0xff]
    %v1936 = vld [vmem:[#allocation12 + $0x78] sm:$0xff]
    %v1937 = vld [vmem:[#allocation12 + $0x80] sm:$0xff]
    %v1938 = vld [vmem:[#allocation12 + $0x88] sm:$0xff]
    %v1939 = vld [vmem:[#allocation12 + $0x90] sm:$0xff]
    %v1940 = vld [vmem:[#allocation12 + $0x98] sm:$0xff]
    %v1941 = vld [vmem:[#allocation12 + $0xa0] sm:$0xff]
    %v1942 = vld [vmem:[#allocation12 + $0xa8] sm:$0xff]
    %v1943 = vld [vmem:[#allocation12 + $0xb0] sm:$0xff]
    %v1944 = vld [vmem:[#allocation12 + $0xb8] sm:$0xff]
    %v1945 = vld [vmem:[#allocation12 + $0xc0] sm:$0xff]
    %v1946 = vld [vmem:[#allocation12 + $0xc8] sm:$0xff]
    %v1947 = vld [vmem:[#allocation12 + $0xd0] sm:$0xff]
    %v1948 = vld [vmem:[#allocation12 + $0xd8] sm:$0xff]
    %v1949 = vld [vmem:[#allocation12 + $0xe0] sm:$0xff]
    %v1950 = vld [vmem:[#allocation12 + $0xe8] sm:$0xff]
    %v1951 = vld [vmem:[#allocation12 + $0xf0] sm:$0xff]
    %v1952 = vld [vmem:[#allocation12 + $0xf8] sm:$0xff]
    %v1953 = vld [vmem:[#allocation13] sm:$0x1]
    %v1955 = vlaneseq
    %v1956 = vshrl.u32 %v1955, 7
    %v1957 = vsub.s32 0, %v1956
    %v1958 = vrot.slane %v1953, %v1957
    %1960 = vmatprep.subr.mxu0 0.0
    %1961 = vmatpush1.msra.mxu0 %v1921
    %1962 = vmatprep.subr.mxu0 0.0
    %1963 = vmatpush1.msra.mxu0 %v1922
    %1964 = vmatprep.subr.mxu0 0.0
    %1965 = vmatpush1.msra.mxu0 %v1923
    %1966 = vmatprep.subr.mxu0 0.0
    %1967 = vmatpush1.msra.mxu0 %v1924
    %1968 = vmatprep.subr.mxu0 0.0
    %1969 = vmatpush1.msra.mxu0 %v1925
    %1970 = vmatprep.subr.mxu0 0.0
    %1971 = vmatpush1.msra.mxu0 %v1926
    %1972 = vmatprep.subr.mxu0 0.0
    %1973 = vmatpush1.msra.mxu0 %v1927
    %1974 = vmatprep.subr.mxu0 0.0
    %1975 = vmatpush1.msra.mxu0 %v1928
    %1976 = vmatprep.subr.mxu0 0.0
    %1977 = vmatpush1.msra.mxu0 %v1929
    %1978 = vmatprep.subr.mxu0 0.0
    %1979 = vmatpush1.msra.mxu0 %v1930
    %1980 = vmatprep.subr.mxu0 0.0
    %1981 = vmatpush1.msra.mxu0 %v1931
    %1982 = vmatprep.subr.mxu0 0.0
    %1983 = vmatpush1.msra.mxu0 %v1932
    %1984 = vmatprep.subr.mxu0 0.0
    %1985 = vmatpush1.msra.mxu0 %v1933
    %1986 = vmatprep.subr.mxu0 0.0
    %1987 = vmatpush1.msra.mxu0 %v1934
    %1988 = vmatprep.subr.mxu0 0.0
    %1989 = vmatpush1.msra.mxu0 %v1935
    %1990 = vmatprep.subr.mxu0 0.0
    %1991 = vmatpush1.msra.mxu0 %v1936
    %1992 = vmatprep.subr.mxu0 0.0
    %1993 = vmatpush1.msra.mxu0 %v1937
    %1994 = vmatprep.subr.mxu0 0.0
    %1995 = vmatpush1.msra.mxu0 %v1938
    %1996 = vmatprep.subr.mxu0 0.0
    %1997 = vmatpush1.msra.mxu0 %v1939
    %1998 = vmatprep.subr.mxu0 0.0
    %1999 = vmatpush1.msra.mxu0 %v1940
    %2000 = vmatprep.subr.mxu0 0.0
    %2001 = vmatpush1.msra.mxu0 %v1941
    %2002 = vmatprep.subr.mxu0 0.0
    %2003 = vmatpush1.msra.mxu0 %v1942
    %2004 = vmatprep.subr.mxu0 0.0
    %2005 = vmatpush1.msra.mxu0 %v1943
    %2006 = vmatprep.subr.mxu0 0.0
    %2007 = vmatpush1.msra.mxu0 %v1944
    %2008 = vmatprep.subr.mxu0 0.0
    %2009 = vmatpush1.msra.mxu0 %v1945
    %2010 = vmatprep.subr.mxu0 0.0
    %2011 = vmatpush1.msra.mxu0 %v1946
    %2012 = vmatprep.subr.mxu0 0.0
    %2013 = vmatpush1.msra.mxu0 %v1947
    %2014 = vmatprep.subr.mxu0 0.0
    %2015 = vmatpush1.msra.mxu0 %v1948
    %2016 = vmatprep.subr.mxu0 0.0
    %2017 = vmatpush1.msra.mxu0 %v1949
    %2018 = vmatprep.subr.mxu0 0.0
    %2019 = vmatpush1.msra.mxu0 %v1950
    %2020 = vmatprep.subr.mxu0 0.0
    %2021 = vmatpush1.msra.mxu0 %v1951
    %2022 = vmatprep.subr.mxu0 0.0
    %2023 = vmatpush1.msra.mxu0 %v1952
    %2024 = vmatprep.mubr.f32.mxu0 %v1920
    %2025 = vmatmul.mubr.f32.gmra.mrb[0].mxu0 %v1919
    %v2026 = vpop.f32.mrb[0].mxu0
    %v2027 = vadd.f32 %v1958, %v2026
    %v2028 = vpop.f32.mrb[0].mxu0
    %2029 = vdwg.mxu0
    %v2030 = vld [vmem:[#allocation15] sm:$0xff]
    %v2031 = vld [vmem:[#allocation15 + $0x8] sm:$0xff]
    %v2032 = vld [vmem:[#allocation15 + $0x10] sm:$0xff]
    %v2033 = vld [vmem:[#allocation15 + $0x18] sm:$0xff]
    %v2034 = vld [vmem:[#allocation15 + $0x20] sm:$0xff]
    %v2035 = vld [vmem:[#allocation15 + $0x28] sm:$0xff]
    %v2036 = vld [vmem:[#allocation15 + $0x30] sm:$0xff]
    %v2037 = vld [vmem:[#allocation15 + $0x38] sm:$0xff]
    %v2038 = vld [vmem:[#allocation15 + $0x40] sm:$0xff]
    %v2039 = vld [vmem:[#allocation15 + $0x48] sm:$0xff]
    %v2040 = vld [vmem:[#allocation15 + $0x50] sm:$0xff]
    %v2041 = vld [vmem:[#allocation15 + $0x58] sm:$0xff]
    %v2042 = vld [vmem:[#allocation15 + $0x60] sm:$0xff]
    %v2043 = vld [vmem:[#allocation15 + $0x68] sm:$0xff]
    %v2044 = vld [vmem:[#allocation15 + $0x70] sm:$0xff]
    %v2045 = vld [vmem:[#allocation15 + $0x78] sm:$0xff]
    %v2046 = vld [vmem:[#allocation15 + $0x80] sm:$0xff]
    %v2047 = vld [vmem:[#allocation15 + $0x88] sm:$0xff]
    %v2048 = vld [vmem:[#allocation15 + $0x90] sm:$0xff]
    %v2049 = vld [vmem:[#allocation15 + $0x98] sm:$0xff]
    %v2050 = vld [vmem:[#allocation15 + $0xa0] sm:$0xff]
    %v2051 = vld [vmem:[#allocation15 + $0xa8] sm:$0xff]
    %v2052 = vld [vmem:[#allocation15 + $0xb0] sm:$0xff]
    %v2053 = vld [vmem:[#allocation15 + $0xb8] sm:$0xff]
    %v2054 = vld [vmem:[#allocation15 + $0xc0] sm:$0xff]
    %v2055 = vld [vmem:[#allocation15 + $0xc8] sm:$0xff]
    %v2056 = vld [vmem:[#allocation15 + $0xd0] sm:$0xff]
    %v2057 = vld [vmem:[#allocation15 + $0xd8] sm:$0xff]
    %v2058 = vld [vmem:[#allocation15 + $0xe0] sm:$0xff]
    %v2059 = vld [vmem:[#allocation15 + $0xe8] sm:$0xff]
    %v2060 = vld [vmem:[#allocation15 + $0xf0] sm:$0xff]
    %v2061 = vld [vmem:[#allocation15 + $0xf8] sm:$0xff]
    %2062 = vmatprep.subr.mxu0 %v2031
    %2063 = vmatpush1.msra.mxu0 %v2030
    %2064 = vmatprep.subr.mxu0 %v2033
    %2065 = vmatpush1.msra.mxu0 %v2032
    %2066 = vmatprep.subr.mxu0 %v2035
    %2067 = vmatpush1.msra.mxu0 %v2034
    %2068 = vmatprep.subr.mxu0 %v2037
    %2069 = vmatpush1.msra.mxu0 %v2036
    %2070 = vmatprep.subr.mxu0 %v2039
    %2071 = vmatpush1.msra.mxu0 %v2038
    %2072 = vmatprep.subr.mxu0 %v2041
    %2073 = vmatpush1.msra.mxu0 %v2040
    %2074 = vmatprep.subr.mxu0 %v2043
    %2075 = vmatpush1.msra.mxu0 %v2042
    %2076 = vmatprep.subr.mxu0 %v2045
    %2077 = vmatpush1.msra.mxu0 %v2044
    %2078 = vmatprep.subr.mxu0 %v2047
    %2079 = vmatpush1.msra.mxu0 %v2046
    %2080 = vmatprep.subr.mxu0 %v2049
    %2081 = vmatpush1.msra.mxu0 %v2048
    %2082 = vmatprep.subr.mxu0 %v2051
    %2083 = vmatpush1.msra.mxu0 %v2050
    %2084 = vmatprep.subr.mxu0 %v2053
    %2085 = vmatpush1.msra.mxu0 %v2052
    %2086 = vmatprep.subr.mxu0 %v2055
    %2087 = vmatpush1.msra.mxu0 %v2054
    %2088 = vmatprep.subr.mxu0 %v2057
    %2089 = vmatpush1.msra.mxu0 %v2056
    %2090 = vmatprep.subr.mxu0 %v2059
    %2091 = vmatpush1.msra.mxu0 %v2058
    %2092 = vmatprep.subr.mxu0 %v2061
    %2093 = vmatpush1.msra.mxu0 %v2060
    %2094 = vmatprep.subr.mxu0 0.0
    %2095 = vmatpush1.msra.mxu0 0.0
    %2096 = vmatprep.subr.mxu0 0.0
    %2097 = vmatpush1.msra.mxu0 0.0
    %2098 = vmatprep.subr.mxu0 0.0
    %2099 = vmatpush1.msra.mxu0 0.0
    %2100 = vmatprep.subr.mxu0 0.0
    %2101 = vmatpush1.msra.mxu0 0.0
    %2102 = vmatprep.subr.mxu0 0.0
    %2103 = vmatpush1.msra.mxu0 0.0
    %2104 = vmatprep.subr.mxu0 0.0
    %2105 = vmatpush1.msra.mxu0 0.0
    %2106 = vmatprep.subr.mxu0 0.0
    %2107 = vmatpush1.msra.mxu0 0.0
    %2108 = vmatprep.subr.mxu0 0.0
    %2109 = vmatpush1.msra.mxu0 0.0
    %2110 = vmatprep.subr.mxu0 0.0
    %2111 = vmatpush1.msra.mxu0 0.0
    %2112 = vmatprep.subr.mxu0 0.0
    %2113 = vmatpush1.msra.mxu0 0.0
    %2114 = vmatprep.subr.mxu0 0.0
    %2115 = vmatpush1.msra.mxu0 0.0
    %2116 = vmatprep.subr.mxu0 0.0
    %2117 = vmatpush1.msra.mxu0 0.0
    %2118 = vmatprep.subr.mxu0 0.0
    %2119 = vmatpush1.msra.mxu0 0.0
    %2120 = vmatprep.subr.mxu0 0.0
    %2121 = vmatpush1.msra.mxu0 0.0
    %2122 = vmatprep.subr.mxu0 0.0
    %2123 = vmatpush1.msra.mxu0 0.0
    %2124 = vmatprep.subr.mxu0 0.0
    %2125 = vmatpush1.msra.mxu0 0.0
    %2126 = vmatprep.mubr.f32.mxu0 0.0
    %2127 = vmatmul.mubr.f32.gmra.mrb[0].mxu0 %v2027
    %v2128 = vpop.f32.mrb[0].mxu0
    %v2129 = vadd.f32 0.0, %v2128
    %v2130 = vpop.f32.mrb[0].mxu0
    %v2131 = vadd.f32 0.0, %v2130
    %2132 = vdwg.mxu0
    %v2133 = vadd.f32 %v1766, %v2129
    %v2134 = vadd.f32 %v1768, %v2131
    %v2135 = vmax.f32 %v2133, 0.0
    %v2136 = vmax.f32 %v2134, 0.0
    %v2137 = vld [vmem:[#allocation16] sm:$0xff]
    %v2138 = vld [vmem:[#allocation16 + $0x8] sm:$0xff]
    %v2139 = vld [vmem:[#allocation16 + $0x10] sm:$0xff]
    %v2140 = vld [vmem:[#allocation16 + $0x18] sm:$0xff]
    %v2141 = vld [vmem:[#allocation16 + $0x20] sm:$0xff]
    %v2142 = vld [vmem:[#allocation16 + $0x28] sm:$0xff]
    %v2143 = vld [vmem:[#allocation16 + $0x30] sm:$0xff]
    %v2144 = vld [vmem:[#allocation16 + $0x38] sm:$0xff]
    %v2145 = vld [vmem:[#allocation16 + $0x40] sm:$0xff]
    %v2146 = vld [vmem:[#allocation16 + $0x48] sm:$0xff]
    %v2147 = vld [vmem:[#allocation16 + $0x50] sm:$0xff]
    %v2148 = vld [vmem:[#allocation16 + $0x58] sm:$0xff]
    %v2149 = vld [vmem:[#allocation16 + $0x60] sm:$0xff]
    %v2150 = vld [vmem:[#allocation16 + $0x68] sm:$0xff]
    %v2151 = vld [vmem:[#allocation16 + $0x70] sm:$0xff]
    %v2152 = vld [vmem:[#allocation16 + $0x78] sm:$0xff]
    %v2153 = vld [vmem:[#allocation16 + $0x80] sm:$0xff]
    %v2154 = vld [vmem:[#allocation16 + $0x88] sm:$0xff]
    %v2155 = vld [vmem:[#allocation16 + $0x90] sm:$0xff]
    %v2156 = vld [vmem:[#allocation16 + $0x98] sm:$0xff]
    %v2157 = vld [vmem:[#allocation16 + $0xa0] sm:$0xff]
    %v2158 = vld [vmem:[#allocation16 + $0xa8] sm:$0xff]
    %v2159 = vld [vmem:[#allocation16 + $0xb0] sm:$0xff]
    %v2160 = vld [vmem:[#allocation16 + $0xb8] sm:$0xff]
    %v2161 = vld [vmem:[#allocation16 + $0xc0] sm:$0xff]
    %v2162 = vld [vmem:[#allocation16 + $0xc8] sm:$0xff]
    %v2163 = vld [vmem:[#allocation16 + $0xd0] sm:$0xff]
    %v2164 = vld [vmem:[#allocation16 + $0xd8] sm:$0xff]
    %v2165 = vld [vmem:[#allocation16 + $0xe0] sm:$0xff]
    %v2166 = vld [vmem:[#allocation16 + $0xe8] sm:$0xff]
    %v2167 = vld [vmem:[#allocation16 + $0xf0] sm:$0xff]
    %v2168 = vld [vmem:[#allocation16 + $0xf8] sm:$0xff]
    %v2169 = vld [vmem:[#allocation16 + $0x100] sm:$0xff]
    %v2170 = vld [vmem:[#allocation16 + $0x108] sm:$0xff]
    %v2171 = vld [vmem:[#allocation16 + $0x110] sm:$0xff]
    %v2172 = vld [vmem:[#allocation16 + $0x118] sm:$0xff]
    %v2173 = vld [vmem:[#allocation16 + $0x120] sm:$0xff]
    %v2174 = vld [vmem:[#allocation16 + $0x128] sm:$0xff]
    %v2175 = vld [vmem:[#allocation16 + $0x130] sm:$0xff]
    %v2176 = vld [vmem:[#allocation16 + $0x138] sm:$0xff]
    %v2177 = vld [vmem:[#allocation16 + $0x140] sm:$0xff]
    %v2178 = vld [vmem:[#allocation16 + $0x148] sm:$0xff]
    %v2179 = vld [vmem:[#allocation16 + $0x150] sm:$0xff]
    %v2180 = vld [vmem:[#allocation16 + $0x158] sm:$0xff]
    %v2181 = vld [vmem:[#allocation16 + $0x160] sm:$0xff]
    %v2182 = vld [vmem:[#allocation16 + $0x168] sm:$0xff]
    %v2183 = vld [vmem:[#allocation16 + $0x170] sm:$0xff]
    %v2184 = vld [vmem:[#allocation16 + $0x178] sm:$0xff]
    %v2185 = vld [vmem:[#allocation16 + $0x180] sm:$0xff]
    %v2186 = vld [vmem:[#allocation16 + $0x188] sm:$0xff]
    %v2187 = vld [vmem:[#allocation16 + $0x190] sm:$0xff]
    %v2188 = vld [vmem:[#allocation16 + $0x198] sm:$0xff]
    %v2189 = vld [vmem:[#allocation16 + $0x1a0] sm:$0xff]
    %v2190 = vld [vmem:[#allocation16 + $0x1a8] sm:$0xff]
    %v2191 = vld [vmem:[#allocation16 + $0x1b0] sm:$0xff]
    %v2192 = vld [vmem:[#allocation16 + $0x1b8] sm:$0xff]
    %v2193 = vld [vmem:[#allocation16 + $0x1c0] sm:$0xff]
    %v2194 = vld [vmem:[#allocation16 + $0x1c8] sm:$0xff]
    %v2195 = vld [vmem:[#allocation16 + $0x1d0] sm:$0xff]
    %v2196 = vld [vmem:[#allocation16 + $0x1d8] sm:$0xff]
    %v2197 = vld [vmem:[#allocation16 + $0x1e0] sm:$0xff]
    %v2198 = vld [vmem:[#allocation16 + $0x1e8] sm:$0xff]
    %v2199 = vld [vmem:[#allocation16 + $0x1f0] sm:$0xff]
    %v2200 = vld [vmem:[#allocation16 + $0x1f8] sm:$0xff]
    %v2201 = vld [vmem:[#allocation18] sm:$0x3]
    %v2203 = vlaneseq
    %v2204 = vshrl.u32 %v2203, 7
    %v2205 = vsub.s32 0, %v2204
    %v2206 = vrot.slane %v2201, %v2205
    %v2207 = vlaneseq
    %v2208 = vshrl.u32 %v2207, 7
    %v2209 = vsub.s32 1, %v2208
    %v2210 = vrot.slane %v2201, %v2209
    %2213 = vmatprep.subr.mxu0 %v2138
    %2214 = vmatpush1.msra.mxu0 %v2137
    %2215 = vmatprep.subr.mxu0 %v2140
    %2216 = vmatpush1.msra.mxu0 %v2139
    %2217 = vmatprep.subr.mxu0 %v2142
    %2218 = vmatpush1.msra.mxu0 %v2141
    %2219 = vmatprep.subr.mxu0 %v2144
    %2220 = vmatpush1.msra.mxu0 %v2143
    %2221 = vmatprep.subr.mxu0 %v2146
    %2222 = vmatpush1.msra.mxu0 %v2145
    %2223 = vmatprep.subr.mxu0 %v2148
    %2224 = vmatpush1.msra.mxu0 %v2147
    %2225 = vmatprep.subr.mxu0 %v2150
    %2226 = vmatpush1.msra.mxu0 %v2149
    %2227 = vmatprep.subr.mxu0 %v2152
    %2228 = vmatpush1.msra.mxu0 %v2151
    %2229 = vmatprep.subr.mxu0 %v2154
    %2230 = vmatpush1.msra.mxu0 %v2153
    %2231 = vmatprep.subr.mxu0 %v2156
    %2232 = vmatpush1.msra.mxu0 %v2155
    %2233 = vmatprep.subr.mxu0 %v2158
    %2234 = vmatpush1.msra.mxu0 %v2157
    %2235 = vmatprep.subr.mxu0 %v2160
    %2236 = vmatpush1.msra.mxu0 %v2159
    %2237 = vmatprep.subr.mxu0 %v2162
    %2238 = vmatpush1.msra.mxu0 %v2161
    %2239 = vmatprep.subr.mxu0 %v2164
    %2240 = vmatpush1.msra.mxu0 %v2163
    %2241 = vmatprep.subr.mxu0 %v2166
    %2242 = vmatpush1.msra.mxu0 %v2165
    %2243 = vmatprep.subr.mxu0 %v2168
    %2244 = vmatpush1.msra.mxu0 %v2167
    %2245 = vmatprep.subr.mxu0 %v2170
    %2246 = vmatpush1.msra.mxu0 %v2169
    %2247 = vmatprep.subr.mxu0 %v2172
    %2248 = vmatpush1.msra.mxu0 %v2171
    %2249 = vmatprep.subr.mxu0 %v2174
    %2250 = vmatpush1.msra.mxu0 %v2173
    %2251 = vmatprep.subr.mxu0 %v2176
    %2252 = vmatpush1.msra.mxu0 %v2175
    %2253 = vmatprep.subr.mxu0 %v2178
    %2254 = vmatpush1.msra.mxu0 %v2177
    %2255 = vmatprep.subr.mxu0 %v2180
    %2256 = vmatpush1.msra.mxu0 %v2179
    %2257 = vmatprep.subr.mxu0 %v2182
    %2258 = vmatpush1.msra.mxu0 %v2181
    %2259 = vmatprep.subr.mxu0 %v2184
    %2260 = vmatpush1.msra.mxu0 %v2183
    %2261 = vmatprep.subr.mxu0 %v2186
    %2262 = vmatpush1.msra.mxu0 %v2185
    %2263 = vmatprep.subr.mxu0 %v2188
    %2264 = vmatpush1.msra.mxu0 %v2187
    %2265 = vmatprep.subr.mxu0 %v2190
    %2266 = vmatpush1.msra.mxu0 %v2189
    %2267 = vmatprep.subr.mxu0 %v2192
    %2268 = vmatpush1.msra.mxu0 %v2191
    %2269 = vmatprep.subr.mxu0 %v2194
    %2270 = vmatpush1.msra.mxu0 %v2193
    %2271 = vmatprep.subr.mxu0 %v2196
    %2272 = vmatpush1.msra.mxu0 %v2195
    %2273 = vmatprep.subr.mxu0 %v2198
    %2274 = vmatpush1.msra.mxu0 %v2197
    %2275 = vmatprep.subr.mxu0 %v2200
    %2276 = vmatpush1.msra.mxu0 %v2199
    %2277 = vmatprep.mubr.f32.mxu0 %v2136
    %2278 = vmatmul.mubr.f32.gmra.mrb[0].mxu0 %v2135
    %v2279 = vpop.f32.mrb[0].mxu0
    %v2280 = vadd.f32 %v2206, %v2279
    %v2281 = vpop.f32.mrb[0].mxu0
    %v2282 = vadd.f32 %v2210, %v2281
    %2283 = vdwg.mxu0
    %v2284 = vmax.f32 %v2280, 0.0
    %v2285 = vmax.f32 %v2282, 0.0
    %v2286 = vld [vmem:[#allocation19] sm:$0xff]
    %v2287 = vld [vmem:[#allocation19 + $0x8] sm:$0xff]
    %v2288 = vld [vmem:[#allocation19 + $0x10] sm:$0xff]
    %v2289 = vld [vmem:[#allocation19 + $0x18] sm:$0xff]
    %v2290 = vld [vmem:[#allocation19 + $0x20] sm:$0xff]
    %v2291 = vld [vmem:[#allocation19 + $0x28] sm:$0xff]
    %v2292 = vld [vmem:[#allocation19 + $0x30] sm:$0xff]
    %v2293 = vld [vmem:[#allocation19 + $0x38] sm:$0xff]
    %v2294 = vld [vmem:[#allocation19 + $0x40] sm:$0xff]
    %v2295 = vld [vmem:[#allocation19 + $0x48] sm:$0xff]
    %v2296 = vld [vmem:[#allocation19 + $0x50] sm:$0xff]
    %v2297 = vld [vmem:[#allocation19 + $0x58] sm:$0xff]
    %v2298 = vld [vmem:[#allocation19 + $0x60] sm:$0xff]
    %v2299 = vld [vmem:[#allocation19 + $0x68] sm:$0xff]
    %v2300 = vld [vmem:[#allocation19 + $0x70] sm:$0xff]
    %v2301 = vld [vmem:[#allocation19 + $0x78] sm:$0xff]
    %v2302 = vld [vmem:[#allocation19 + $0x80] sm:$0xff]
    %v2303 = vld [vmem:[#allocation19 + $0x88] sm:$0xff]
    %v2304 = vld [vmem:[#allocation19 + $0x90] sm:$0xff]
    %v2305 = vld [vmem:[#allocation19 + $0x98] sm:$0xff]
    %v2306 = vld [vmem:[#allocation19 + $0xa0] sm:$0xff]
    %v2307 = vld [vmem:[#allocation19 + $0xa8] sm:$0xff]
    %v2308 = vld [vmem:[#allocation19 + $0xb0] sm:$0xff]
    %v2309 = vld [vmem:[#allocation19 + $0xb8] sm:$0xff]
    %v2310 = vld [vmem:[#allocation19 + $0xc0] sm:$0xff]
    %v2311 = vld [vmem:[#allocation19 + $0xc8] sm:$0xff]
    %v2312 = vld [vmem:[#allocation19 + $0xd0] sm:$0xff]
    %v2313 = vld [vmem:[#allocation19 + $0xd8] sm:$0xff]
    %v2314 = vld [vmem:[#allocation19 + $0xe0] sm:$0xff]
    %v2315 = vld [vmem:[#allocation19 + $0xe8] sm:$0xff]
    %v2316 = vld [vmem:[#allocation19 + $0xf0] sm:$0xff]
    %v2317 = vld [vmem:[#allocation19 + $0xf8] sm:$0xff]
    %v2318 = vld [vmem:[#allocation21] sm:$0x1]
    %v2320 = vlaneseq
    %v2321 = vshrl.u32 %v2320, 7
    %v2322 = vsub.s32 0, %v2321
    %v2323 = vrot.slane %v2318, %v2322
    %2325 = vmatprep.subr.mxu0 0.0
    %2326 = vmatpush1.msra.mxu0 %v2286
    %2327 = vmatprep.subr.mxu0 0.0
    %2328 = vmatpush1.msra.mxu0 %v2287
    %2329 = vmatprep.subr.mxu0 0.0
    %2330 = vmatpush1.msra.mxu0 %v2288
    %2331 = vmatprep.subr.mxu0 0.0
    %2332 = vmatpush1.msra.mxu0 %v2289
    %2333 = vmatprep.subr.mxu0 0.0
    %2334 = vmatpush1.msra.mxu0 %v2290
    %2335 = vmatprep.subr.mxu0 0.0
    %2336 = vmatpush1.msra.mxu0 %v2291
    %2337 = vmatprep.subr.mxu0 0.0
    %2338 = vmatpush1.msra.mxu0 %v2292
    %2339 = vmatprep.subr.mxu0 0.0
    %2340 = vmatpush1.msra.mxu0 %v2293
    %2341 = vmatprep.subr.mxu0 0.0
    %2342 = vmatpush1.msra.mxu0 %v2294
    %2343 = vmatprep.subr.mxu0 0.0
    %2344 = vmatpush1.msra.mxu0 %v2295
    %2345 = vmatprep.subr.mxu0 0.0
    %2346 = vmatpush1.msra.mxu0 %v2296
    %2347 = vmatprep.subr.mxu0 0.0
    %2348 = vmatpush1.msra.mxu0 %v2297
    %2349 = vmatprep.subr.mxu0 0.0
    %2350 = vmatpush1.msra.mxu0 %v2298
    %2351 = vmatprep.subr.mxu0 0.0
    %2352 = vmatpush1.msra.mxu0 %v2299
    %2353 = vmatprep.subr.mxu0 0.0
    %2354 = vmatpush1.msra.mxu0 %v2300
    %2355 = vmatprep.subr.mxu0 0.0
    %2356 = vmatpush1.msra.mxu0 %v2301
    %2357 = vmatprep.subr.mxu0 0.0
    %2358 = vmatpush1.msra.mxu0 %v2302
    %2359 = vmatprep.subr.mxu0 0.0
    %2360 = vmatpush1.msra.mxu0 %v2303
    %2361 = vmatprep.subr.mxu0 0.0
    %2362 = vmatpush1.msra.mxu0 %v2304
    %2363 = vmatprep.subr.mxu0 0.0
    %2364 = vmatpush1.msra.mxu0 %v2305
    %2365 = vmatprep.subr.mxu0 0.0
    %2366 = vmatpush1.msra.mxu0 %v2306
    %2367 = vmatprep.subr.mxu0 0.0
    %2368 = vmatpush1.msra.mxu0 %v2307
    %2369 = vmatprep.subr.mxu0 0.0
    %2370 = vmatpush1.msra.mxu0 %v2308
    %2371 = vmatprep.subr.mxu0 0.0
    %2372 = vmatpush1.msra.mxu0 %v2309
    %2373 = vmatprep.subr.mxu0 0.0
    %2374 = vmatpush1.msra.mxu0 %v2310
    %2375 = vmatprep.subr.mxu0 0.0
    %2376 = vmatpush1.msra.mxu0 %v2311
    %2377 = vmatprep.subr.mxu0 0.0
    %2378 = vmatpush1.msra.mxu0 %v2312
    %2379 = vmatprep.subr.mxu0 0.0
    %2380 = vmatpush1.msra.mxu0 %v2313
    %2381 = vmatprep.subr.mxu0 0.0
    %2382 = vmatpush1.msra.mxu0 %v2314
    %2383 = vmatprep.subr.mxu0 0.0
    %2384 = vmatpush1.msra.mxu0 %v2315
    %2385 = vmatprep.subr.mxu0 0.0
    %2386 = vmatpush1.msra.mxu0 %v2316
    %2387 = vmatprep.subr.mxu0 0.0
    %2388 = vmatpush1.msra.mxu0 %v2317
    %2389 = vmatprep.mubr.f32.mxu0 %v2285
    %2390 = vmatmul.mubr.f32.gmra.mrb[0].mxu0 %v2284
    %v2391 = vpop.f32.mrb[0].mxu0
    %v2392 = vadd.f32 %v2323, %v2391
    %v2393 = vpop.f32.mrb[0].mxu0
    %2394 = vdwg.mxu0
    %2395 = vst [vmem:[%s14] sm:$0xff] %v2027
    %2396 = vst [vmem:[%s15] sm:$0xff] %v2392
    // Predicated region
    $region110: #{demo_model_forward.1} parent=1 // pred_check
      _
    $region111: #{demo_model_forward.1} parent=1 // pred_check_branch
      %2398 = sbr.rel (0) target = $region113
    $region112: #{demo_model_forward.1} parent=1 // pred_region
      _
    $region113: #{demo_model_forward.1} parent=1 // pred_fallthru
      _
    // Predicated region
    $region114: #{demo_model_forward.1} parent=1 // pred_check
      _
    $region115: #{demo_model_forward.1} parent=1 // pred_check_branch
      %2400 = sbr.rel (0) target = $region117
    $region116: #{demo_model_forward.1} parent=1 // pred_region
      _
    $region117: #{demo_model_forward.1} parent=1 // pred_fallthru
      _
    // Predicated region
    $region118: #{demo_model_forward.1} parent=1 // pred_check
      _
    $region119: #{demo_model_forward.1} parent=1 // pred_check_branch
      %2402 = sbr.rel (0) target = $region121
    $region120: #{demo_model_forward.1} parent=1 // pred_region
      _
    $region121: #{demo_model_forward.1} parent=1 // pred_fallthru
      _
    // Predicated region
    $region122: #{demo_model_forward.1} parent=1 // pred_check
      _
    $region123: #{demo_model_forward.1} parent=1 // pred_check_branch
      %2404 = sbr.rel (0) target = $region125
    $region124: #{demo_model_forward.1} parent=1 // pred_region
      _
    $region125: #{demo_model_forward.1} parent=1 // pred_fallthru
      _
    %2405 = vsyncpa [#allocation3], 1
    %2406 = vsyncpa [#allocation5], 1
    %2407 = vsyncpa [#allocation8], 1
    %2408 = vsyncpa [#allocation11], 1
    %2409 = vsyncpa [#allocation14], 1
    %2410 = vsyncpa [#allocation17], 1
    %2411 = vsyncpa [#allocation20], 1

</llo_original>
